<compile_context>
chip_gen: v7x
topology: tpu7x:2x2x1
jax: 0.10.0
libtpu: 0.0.40
codegen_flags: <defaults>
</compile_context>

<pallas_src>
import numpy as np

import jax
import jax.numpy as jnp
from jax import lax
from jax.experimental import pallas as pl
from jax.experimental.pallas import tpu as pltpu

VMEM_SPEC = pl.BlockSpec(memory_space=pltpu.MemorySpace.VMEM)


def _round_up(x, m):
    return ((x + m - 1) // m) * m


# ------------------------------ Pallas kernel ------------------------------

def _make_fused_kernel(n_conv, n_lin, h_pad):
    """Conv stack (as dense matmuls) + linear stack + LSTM cell, all in VMEM."""

    def kernel(*refs):
        idx = 0
        x_ref = refs[idx]; idx += 1
        conv_refs = refs[idx:idx + 2 * n_conv]; idx += 2 * n_conv
        lin_refs = refs[idx:idx + 2 * n_lin]; idx += 2 * n_lin
        (wx_ref, wh_ref, bg_ref, h_ref, c_ref,
         h_out_ref, c_out_ref) = refs[idx:]

        # Encoder: each layer is relu(y @ W + b); bf16 operands, f32 accum.
        y = x_ref[...]                                     # bf16 (B_pad, Fin)
        for i in range(n_conv):
            w = conv_refs[2 * i][...]
            b = conv_refs[2 * i + 1][...]
            y = jnp.maximum(
                jnp.dot(y.astype(jnp.bfloat16), w,
                        preferred_element_type=jnp.float32) + b, 0.0)
        for i in range(n_lin):
            w = lin_refs[2 * i][...]
            b = lin_refs[2 * i + 1][...]
            y = jnp.maximum(
                jnp.dot(y.astype(jnp.bfloat16), w,
                        preferred_element_type=jnp.float32) + b, 0.0)

        # LSTM cell: two f32 gate dots (no lane concat), f32 state math.
        gates = (jnp.dot(y, wx_ref[...], preferred_element_type=jnp.float32)
                 + jnp.dot(h_ref[...], wh_ref[...],
                           preferred_element_type=jnp.float32)
                 + bg_ref[...])

        # PyTorch gate order i, f, g, o; each gate block is h_pad (128) lanes.
        i_g = jax.nn.sigmoid(gates[:, 0 * h_pad:1 * h_pad])
        f_g = jax.nn.sigmoid(gates[:, 1 * h_pad:2 * h_pad])
        g_g = jnp.tanh(gates[:, 2 * h_pad:3 * h_pad])
        o_g = jax.nn.sigmoid(gates[:, 3 * h_pad:4 * h_pad])

        c_new = f_g * c_ref[...] + i_g * g_g
        h_new = o_g * jnp.tanh(c_new)
        c_out_ref[...] = c_new
        h_out_ref[...] = h_new

    return kernel


def fused_forward_pallas(x_flat, h_in, c_in, params, arch):
    n_conv = len(params["conv"])
    n_lin = len(params["lin"])
    b_pad = x_flat.shape[0]
    h_pad = arch["h_pad"]

    args = [x_flat]
    for w, b in params["conv"]:
        args += [w, b]
    for w, b in params["lin"]:
        args += [w, b]
    args += [params["lstm"]["wx"], params["lstm"]["wh"], params["lstm"]["bg"],
             h_in, c_in]

    return pl.pallas_call(
        _make_fused_kernel(n_conv, n_lin, h_pad),
        out_shape=(jax.ShapeDtypeStruct((b_pad, h_pad), jnp.float32),
                   jax.ShapeDtypeStruct((b_pad, h_pad), jnp.float32)),
        in_specs=[VMEM_SPEC] * len(args),
        out_specs=(VMEM_SPEC, VMEM_SPEC),
        compiler_params=pltpu.CompilerParams(
            # Forward-looking guard for v7x's smaller VMEM; current usage ~2MiB.
            vmem_limit_bytes=32 * 1024 * 1024),
    )(*args)


# ------------------------------- forward glue -------------------------------

def encoder_lstm_forward(inputs, states, params, arch):
    """EncoderLSTM.forward.  `2*x-1`, the conv stack and the NCHW flatten are
    all folded into the packed weights at init; runtime glue is only an NHWC
    feature flatten, batch pad to 8 sublanes and a bf16 cast."""
    B = inputs.shape[0]
    H, H_pad = arch["state_size"], arch["h_pad"]
    B_pad = _round_up(B, 8)

    x = jnp.transpose(inputs, (0, 2, 3, 1)).reshape(B, -1)   # NHWC feature rows
    if B_pad != B:
        x = jnp.pad(x, ((0, B_pad - B), (0, 0)))
    x = x.astype(jnp.bfloat16)

    if states is None:
        h_in = jnp.zeros((B_pad, H_pad), jnp.float32)
        c_in = jnp.zeros((B_pad, H_pad), jnp.float32)
    else:
        h, c = states
        h_in = jnp.zeros((B_pad, H_pad), jnp.float32).at[:B, :H].set(h)
        c_in = jnp.zeros((B_pad, H_pad), jnp.float32).at[:B, :H].set(c)

    h_out, c_out = fused_forward_pallas(x, h_in, c_in, params, arch)
    return h_out[:B, :H], c_out[:B, :H]


# ------------------------------ parameter init ------------------------------

def _uniform(key, shape, fan_in):
    bound = float(fan_in) ** -0.5
    return jax.random.uniform(key, shape, jnp.float32, -bound, bound)


def _conv_as_matmul(w, b, stride, h_in, w_in):
    """Lower Conv2d(k, stride, pad=k//2) to a dense (Hin*Win*Cin, Ho*Wo*Cout)
    matrix acting on an NHWC row-major feature vector (features on lanes).
    Out-of-bounds taps are simply absent rows (== zero padding)."""
    cout, cin, k, _ = w.shape
    pad = k // 2
    h_out = (h_in + 2 * pad - k) // stride + 1
    w_out = (w_in + 2 * pad - k) // stride + 1
    M = np.zeros((h_in * w_in * cin, h_out * w_out * cout), np.float32)
    brow = np.zeros((h_out * w_out * cout,), np.float32)
    wt = np.transpose(w, (2, 3, 1, 0))                 # (k, k, cin, cout)
    for oh in range(h_out):
        for ow in range(w_out):
            col = (oh * w_out + ow) * cout
            brow[col:col + cout] = b
            for dy in range(k):
                ih = oh * stride + dy - pad
                if ih < 0 or ih >= h_in:
                    continue
                for dx in range(k):
                    iw = ow * stride + dx - pad
                    if iw < 0 or iw >= w_in:
                        continue
                    row = (ih * w_in + iw) * cin
                    M[row:row + cin, col:col + cout] = wt[dy, dx]
    return M, brow, h_out, w_out


def init_params(key, config):
    """Returns (packed Pallas params, torch-layout f32 reference params, arch)."""
    c_in, h_img, w_img = config["in_shape"]
    keys = iter(jax.random.split(key, 32))

    ref = {"conv": [], "lin": []}
    conv_mats = []
    cur_c, cur_h, cur_w = c_in, h_img, w_img
    for cout, k, s in zip(config["channel_list"], config["kernel_list"],
                          config["stride_list"]):
        fan_in = cur_c * k * k
        w = _uniform(next(keys), (cout, cur_c, k, k), fan_in)   # torch OIHW
        b = _uniform(next(keys), (cout,), fan_in)
        ref["conv"].append((w, b, s, k // 2))
        M, brow, cur_h, cur_w = _conv_as_matmul(np.asarray(w), np.asarray(b),
                                                s, cur_h, cur_w)
        conv_mats.append([M, brow])
        cur_c = cout

    # Fold `x = 2*inputs - 1` exactly into the first conv matmul: absent rows
    # already encode the zero padding of the affine image, and the bias
    # correction sums only the present (in-bounds) rows.
    M0, b0 = conv_mats[0]
    conv_mats[0] = [2.0 * M0, b0 - M0.sum(axis=0)]

    # Linear stack; the first layer's K rows are permuted from PyTorch's NCHW
    # flatten order to our NHWC lane order at init (no runtime transpose).
    n_pos = cur_h * cur_w
    feat = cur_c * n_pos
    perm = np.arange(feat).reshape(cur_c, n_pos).T.reshape(-1)
    lin_mats = []
    in_f = feat
    for li, hid in enumerate(config["hidden_list"]):
        w = _uniform(next(keys), (hid, in_f), in_f)             # torch (out, in)
        b = _uniform(next(keys), (hid,), in_f)
        ref["lin"].append((w, b))
        wt = np.asarray(w).T
        if li == 0:
            wt = wt[perm, :]
        lin_mats.append((wt, np.asarray(b)))
        in_f = hid

    # LSTMCell (gate order i, f, g, o).  Gate blocks lane-padded to H_pad so
    # gate slices are 128-aligned and state outputs are lane-dense; padded
    # weight columns / bias lanes are zero, so padded gates stay inert.
    H = config["state_size"]
    H_pad = _round_up(H, 128)
    w_ih = _uniform(next(keys), (4 * H, in_f), H)
    w_hh = _uniform(next(keys), (4 * H, H), H)
    b_ih = _uniform(next(keys), (4 * H,), H)
    b_hh = _uniform(next(keys), (4 * H,), H)
    ref["lstm"] = (w_ih, w_hh, b_ih, b_hh)

    wx = np.zeros((in_f, 4 * H_pad), np.float32)
    wh = np.zeros((H_pad, 4 * H_pad), np.float32)
    bg = np.zeros((1, 4 * H_pad), np.float32)
    w_ih_n, w_hh_n = np.asarray(w_ih), np.asarray(w_hh)
    b_n = np.asarray(b_ih) + np.asarray(b_hh)
    for g in range(4):
        wx[:, g * H_pad:g * H_pad + H] = w_ih_n[g * H:(g + 1) * H, :].T
        wh[:H, g * H_pad:g * H_pad + H] = w_hh_n[g * H:(g + 1) * H, :].T
        bg[0, g * H_pad:g * H_pad + H] = b_n[g * H:(g + 1) * H]

    params = {
        "conv": [(jnp.asarray(M, jnp.bfloat16),
                  jnp.asarray(brow, jnp.float32)[None, :])
                 for M, brow in conv_mats],
        "lin": [(jnp.asarray(w, jnp.bfloat16),
                 jnp.asarray(b, jnp.float32)[None, :])
                for w, b in lin_mats],
        "lstm": {"wx": jnp.asarray(wx), "wh": jnp.asarray(wh),
                 "bg": jnp.asarray(bg)},
    }
    arch = {"state_size": H, "h_pad": H_pad}
    return params, ref, arch


# ----------------------- f32 reference (PyTorch math) -----------------------

def encoder_lstm_ref(inputs, states, ref, state_size):
    x = inputs * 2.0 - 1.0
    for (w, b, s, pad) in ref["conv"]:
        x = lax.conv_general_dilated(
            x, w, window_strides=(s, s), padding=[(pad, pad), (pad, pad)],
            dimension_numbers=("NCHW", "OIHW", "NCHW"))
        x = jnp.maximum(x + b[None, :, None, None], 0.0)
    x = x.reshape(x.shape[0], -1)                         # NCHW flatten
    for (w, b) in ref["lin"]:
        x = jnp.maximum(x @ w.T + b, 0.0)
    w_ih, w_hh, b_ih, b_hh = ref["lstm"]
    if states is None:
        h = jnp.zeros((x.shape[0], state_size), jnp.float32)
        c = jnp.zeros((x.shape[0], state_size), jnp.float32)
    else:
        h, c = states
    gates = x @ w_ih.T + b_ih + h @ w_hh.T + b_hh
    i_g, f_g, g_g, o_g = jnp.split(gates, 4, axis=1)
    c_new = jax.nn.sigmoid(f_g) * c + jax.nn.sigmoid(i_g) * jnp.tanh(g_g)
    h_new = jax.nn.sigmoid(o_g) * jnp.tanh(c_new)
    return h_new, c_new


# ----------------------------------- main -----------------------------------

if __name__ == "__main__":
    config = {
        "in_shape": (4, 16, 16),
        "channel_list": [8, 16],
        "kernel_list": [3, 3],
        "stride_list": [2, 2],
        "hidden_list": [32],
        "state_size": 32,
    }
    batch = 2

    key = jax.random.PRNGKey(0)
    k_in, k_par = jax.random.split(key)
    inputs = jax.random.uniform(k_in, (batch,) + config["in_shape"], jnp.float32)
    params, ref_params, arch = init_params(k_par, config)

    fwd = jax.jit(lambda x, p: encoder_lstm_forward(x, None, p, arch))
    h, c = fwd(inputs, params)
    jax.block_until_ready((h, c))

    h_r, c_r = encoder_lstm_ref(inputs, None, ref_params, config["state_size"])
    jax.block_until_ready((h_r, c_r))

    assert h.shape == (batch, config["state_size"])
    assert c.shape == (batch, config["state_size"])
    assert float(jnp.max(jnp.abs(h - h_r))) < 3e-2, "Pallas vs f32 reference mismatch (h)"
    assert float(jnp.max(jnp.abs(c - c_r))) < 3e-2, "Pallas vs f32 reference mismatch (c)"
    print("KERNEL_OK")
</pallas_src>

<mosaic_0001>
module attributes {stable_mosaic.version = 11 : i64} {
  func.func @kernel(%arg0: memref<8x1024xbf16, #tpu.memory_space<vmem>>, %arg1: memref<1024x512xbf16, #tpu.memory_space<vmem>>, %arg2: memref<1x512xf32, #tpu.memory_space<vmem>>, %arg3: memref<512x256xbf16, #tpu.memory_space<vmem>>, %arg4: memref<1x256xf32, #tpu.memory_space<vmem>>, %arg5: memref<256x32xbf16, #tpu.memory_space<vmem>>, %arg6: memref<1x32xf32, #tpu.memory_space<vmem>>, %arg7: memref<32x512xf32, #tpu.memory_space<vmem>>, %arg8: memref<128x512xf32, #tpu.memory_space<vmem>>, %arg9: memref<1x512xf32, #tpu.memory_space<vmem>>, %arg10: memref<8x128xf32, #tpu.memory_space<vmem>>, %arg11: memref<8x128xf32, #tpu.memory_space<vmem>>, %arg12: memref<8x128xf32, #tpu.memory_space<vmem>>, %arg13: memref<8x128xf32, #tpu.memory_space<vmem>>) attributes {dimension_semantics = [], scalar_prefetch = 0 : i64, scratch_operands = 0 : i64, tpu.core_type = #tpu.core_type<tc>} {
    %c0 = arith.constant 0 : index
    %c0_0 = arith.constant 0 : index
    %0 = vector.load %arg0[%c0, %c0_0] : memref<8x1024xbf16, #tpu.memory_space<vmem>>, vector<8x1024xbf16>
    %c0_1 = arith.constant 0 : index
    %c0_2 = arith.constant 0 : index
    %1 = vector.load %arg1[%c0_1, %c0_2] : memref<1024x512xbf16, #tpu.memory_space<vmem>>, vector<1024x512xbf16>
    %c0_3 = arith.constant 0 : index
    %c0_4 = arith.constant 0 : index
    %2 = vector.load %arg2[%c0_3, %c0_4] : memref<1x512xf32, #tpu.memory_space<vmem>>, vector<1x512xf32>
    %cst = arith.constant dense<0.000000e+00> : vector<8x512xf32>
    %3 = tpu.matmul %0, %1, %cst {dimension_numbers = #tpu.dot_dimension_numbers<[1], [0], [0], [1], [0, 0, 1, 1], [], []>} : vector<8x1024xbf16>, vector<1024x512xbf16>, vector<8x512xf32> -> vector<8x512xf32>
    %4 = vector.broadcast %2 : vector<1x512xf32> to vector<8x512xf32>
    %5 = arith.addf %3, %4 : vector<8x512xf32>
    %cst_5 = arith.constant 0.000000e+00 : f32
    %6 = vector.broadcast %cst_5 : f32 to vector<8x512xf32>
    %7 = arith.maximumf %5, %6 : vector<8x512xf32>
    %c0_6 = arith.constant 0 : index
    %c0_7 = arith.constant 0 : index
    %8 = vector.load %arg3[%c0_6, %c0_7] : memref<512x256xbf16, #tpu.memory_space<vmem>>, vector<512x256xbf16>
    %c0_8 = arith.constant 0 : index
    %c0_9 = arith.constant 0 : index
    %9 = vector.load %arg4[%c0_8, %c0_9] : memref<1x256xf32, #tpu.memory_space<vmem>>, vector<1x256xf32>
    %10 = arith.truncf %7 : vector<8x512xf32> to vector<8x512xbf16>
    %cst_10 = arith.constant dense<0.000000e+00> : vector<8x256xf32>
    %11 = tpu.matmul %10, %8, %cst_10 {dimension_numbers = #tpu.dot_dimension_numbers<[1], [0], [0], [1], [0, 0, 1, 1], [], []>} : vector<8x512xbf16>, vector<512x256xbf16>, vector<8x256xf32> -> vector<8x256xf32>
    %12 = vector.broadcast %9 : vector<1x256xf32> to vector<8x256xf32>
    %13 = arith.addf %11, %12 : vector<8x256xf32>
    %cst_11 = arith.constant 0.000000e+00 : f32
    %14 = vector.broadcast %cst_11 : f32 to vector<8x256xf32>
    %15 = arith.maximumf %13, %14 : vector<8x256xf32>
    %c0_12 = arith.constant 0 : index
    %c0_13 = arith.constant 0 : index
    %16 = vector.load %arg5[%c0_12, %c0_13] : memref<256x32xbf16, #tpu.memory_space<vmem>>, vector<256x32xbf16>
    %c0_14 = arith.constant 0 : index
    %c0_15 = arith.constant 0 : index
    %17 = vector.load %arg6[%c0_14, %c0_15] : memref<1x32xf32, #tpu.memory_space<vmem>>, vector<1x32xf32>
    %18 = arith.truncf %15 : vector<8x256xf32> to vector<8x256xbf16>
    %cst_16 = arith.constant dense<0.000000e+00> : vector<8x32xf32>
    %19 = tpu.matmul %18, %16, %cst_16 {dimension_numbers = #tpu.dot_dimension_numbers<[1], [0], [0], [1], [0, 0, 1, 1], [], []>} : vector<8x256xbf16>, vector<256x32xbf16>, vector<8x32xf32> -> vector<8x32xf32>
    %20 = vector.broadcast %17 : vector<1x32xf32> to vector<8x32xf32>
    %21 = arith.addf %19, %20 : vector<8x32xf32>
    %cst_17 = arith.constant 0.000000e+00 : f32
    %22 = vector.broadcast %cst_17 : f32 to vector<8x32xf32>
    %23 = arith.maximumf %21, %22 : vector<8x32xf32>
    %c0_18 = arith.constant 0 : index
    %c0_19 = arith.constant 0 : index
    %24 = vector.load %arg7[%c0_18, %c0_19] : memref<32x512xf32, #tpu.memory_space<vmem>>, vector<32x512xf32>
    %cst_20 = arith.constant dense<0.000000e+00> : vector<8x512xf32>
    %25 = tpu.matmul %23, %24, %cst_20 {dimension_numbers = #tpu.dot_dimension_numbers<[1], [0], [0], [1], [0, 0, 1, 1], [], []>} : vector<8x32xf32>, vector<32x512xf32>, vector<8x512xf32> -> vector<8x512xf32>
    %c0_21 = arith.constant 0 : index
    %c0_22 = arith.constant 0 : index
    %26 = vector.load %arg10[%c0_21, %c0_22] : memref<8x128xf32, #tpu.memory_space<vmem>>, vector<8x128xf32>
    %c0_23 = arith.constant 0 : index
    %c0_24 = arith.constant 0 : index
    %27 = vector.load %arg8[%c0_23, %c0_24] : memref<128x512xf32, #tpu.memory_space<vmem>>, vector<128x512xf32>
    %cst_25 = arith.constant dense<0.000000e+00> : vector<8x512xf32>
    %28 = tpu.matmul %26, %27, %cst_25 {dimension_numbers = #tpu.dot_dimension_numbers<[1], [0], [0], [1], [0, 0, 1, 1], [], []>} : vector<8x128xf32>, vector<128x512xf32>, vector<8x512xf32> -> vector<8x512xf32>
    %29 = arith.addf %25, %28 : vector<8x512xf32>
    %c0_26 = arith.constant 0 : index
    %c0_27 = arith.constant 0 : index
    %30 = vector.load %arg9[%c0_26, %c0_27] : memref<1x512xf32, #tpu.memory_space<vmem>>, vector<1x512xf32>
    %31 = vector.broadcast %30 : vector<1x512xf32> to vector<8x512xf32>
    %32 = arith.addf %29, %31 : vector<8x512xf32>
    %33 = vector.extract_strided_slice %32 {offsets = [0, 0], sizes = [8, 128], strides = [1, 1]} : vector<8x512xf32> to vector<8x128xf32>
    %34 = arith.negf %33 : vector<8x128xf32>
    %35 = math.exp %34 : vector<8x128xf32>
    %cst_28 = arith.constant 1.000000e+00 : f32
    %36 = vector.broadcast %cst_28 : f32 to vector<8x128xf32>
    %37 = arith.addf %36, %35 : vector<8x128xf32>
    %38 = arith.divf %36, %37 : vector<8x128xf32>
    %39 = vector.extract_strided_slice %32 {offsets = [0, 128], sizes = [8, 128], strides = [1, 1]} : vector<8x512xf32> to vector<8x128xf32>
    %40 = arith.negf %39 : vector<8x128xf32>
    %41 = math.exp %40 : vector<8x128xf32>
    %cst_29 = arith.constant 1.000000e+00 : f32
    %42 = vector.broadcast %cst_29 : f32 to vector<8x128xf32>
    %43 = arith.addf %42, %41 : vector<8x128xf32>
    %44 = arith.divf %42, %43 : vector<8x128xf32>
    %45 = vector.extract_strided_slice %32 {offsets = [0, 256], sizes = [8, 128], strides = [1, 1]} : vector<8x512xf32> to vector<8x128xf32>
    %46 = math.tanh %45 : vector<8x128xf32>
    %47 = vector.extract_strided_slice %32 {offsets = [0, 384], sizes = [8, 128], strides = [1, 1]} : vector<8x512xf32> to vector<8x128xf32>
    %48 = arith.negf %47 : vector<8x128xf32>
    %49 = math.exp %48 : vector<8x128xf32>
    %cst_30 = arith.constant 1.000000e+00 : f32
    %50 = vector.broadcast %cst_30 : f32 to vector<8x128xf32>
    %51 = arith.addf %50, %49 : vector<8x128xf32>
    %52 = arith.divf %50, %51 : vector<8x128xf32>
    %c0_31 = arith.constant 0 : index
    %c0_32 = arith.constant 0 : index
    %53 = vector.load %arg11[%c0_31, %c0_32] : memref<8x128xf32, #tpu.memory_space<vmem>>, vector<8x128xf32>
    %54 = arith.mulf %44, %53 : vector<8x128xf32>
    %55 = arith.mulf %38, %46 : vector<8x128xf32>
    %56 = arith.addf %54, %55 : vector<8x128xf32>
    %57 = math.tanh %56 : vector<8x128xf32>
    %58 = arith.mulf %52, %57 : vector<8x128xf32>
    %c0_33 = arith.constant 0 : index
    %c0_34 = arith.constant 0 : index
    %59 = vector.load %arg13[%c0_33, %c0_34] : memref<8x128xf32, #tpu.memory_space<vmem>>, vector<8x128xf32>
    tpu.vector_store %arg13[%c0_33, %c0_34], %56 {strides = array<i32>} : memref<8x128xf32, #tpu.memory_space<vmem>>, vector<8x128xf32>,
    %c0_35 = arith.constant 0 : index
    %c0_36 = arith.constant 0 : index
    %60 = vector.load %arg12[%c0_35, %c0_36] : memref<8x128xf32, #tpu.memory_space<vmem>>, vector<8x128xf32>
    tpu.vector_store %arg12[%c0_35, %c0_36], %58 {strides = array<i32>} : memref<8x128xf32, #tpu.memory_space<vmem>>, vector<8x128xf32>,
    return
  }
}

</mosaic_0001>

<llo_original>
// kernel: _lambda_.1
$region0: #{_lambda_.1}
  #allocation0 [shape = 'u32[]', space=smem, size = 0x4, offset = 0x4, fixed_abs, tag = 'smem constant byte address 0x4 - core index']
  #allocation1 [shape = 'u32[144,128]{1,0:T(1,128)}', space=vmem, size = 0x12000, scoped, tag = 'internal scratch']
  %s0 = inlined_call_operand.vmem [shape: bf16[8,1024], index: 0, kind: input, shape index: {}]
  %s1 = inlined_call_operand.hbm [shape: bf16[1024,512], index: 1, kind: input, shape index: {}]
  %s2 = inlined_call_operand.vmem [shape: f32[1,512], index: 2, kind: input, shape index: {}]
  %s3 = inlined_call_operand.vmem [shape: bf16[512,256], index: 3, kind: input, shape index: {}]
  %s4 = inlined_call_operand.vmem [shape: f32[1,256], index: 4, kind: input, shape index: {}]
  %s5 = inlined_call_operand.vmem [shape: bf16[256,32], index: 5, kind: input, shape index: {}]
  %s6 = inlined_call_operand.vmem [shape: f32[1,32], index: 6, kind: input, shape index: {}]
  %s7 = inlined_call_operand.vmem [shape: f32[32,512], index: 7, kind: input, shape index: {}]
  %s8 = inlined_call_operand.hbm [shape: f32[128,512], index: 8, kind: input, shape index: {}]
  %s9 = inlined_call_operand.vmem [shape: f32[1,512], index: 9, kind: input, shape index: {}]
  %s10 = inlined_call_operand.vmem [shape: f32[8,128], index: 10, kind: input, shape index: {}, may-alias: {10,11}]
  %s11 = inlined_call_operand.vmem [shape: f32[8,128], index: 11, kind: input, shape index: {}, may-alias: {10,11}]
  %s12 = inlined_call_operand.vmem [shape: f32[8,128], index: 12, kind: output, shape index: {0}]
  %s13 = inlined_call_operand.vmem [shape: f32[8,128], index: 13, kind: output, shape index: {1}]
  %14 = xla_tuple %s12, %s13
  %s15 = sld [smem:[#allocation0]]
  $region74: #{_lambda_.1} parent=0
    _
  %s17 = ssub.s32 1, %s15
  %s18 = scalar_select 0, %s17, %s15
  $region1: #{_lambda_.1} parent=0
    #allocation2 [shape = 'u8[1048576]{0}', space=vmem, size = 0x100000, scoped, tag = 'input window, operand 1, single buffered']
    #allocation3 [shape = 's32[1]{0}', space=sflag, size = 0x4, scoped, tag = 'scoped memory for _lambda_.1']
    #allocation4 [shape = 'u8[262144]{0}', space=vmem, size = 0x40000, scoped, tag = 'input window, operand 8, single buffered']
    #allocation5 [shape = 's32[1]{0}', space=sflag, size = 0x4, scoped, tag = 'scoped memory for _lambda_.1']
    %19 = vsyncpa [#allocation3], 0
    %20 = vsyncpa [#allocation5], 0
    // Predicated region
    $region2: #{_lambda_.1} parent=1 // pred_check
      _
    $region3: #{_lambda_.1} parent=1 // pred_check_branch
      %22 = sbr.rel (0) target = $region5
    $region4: #{_lambda_.1} parent=1 // pred_region
      _
    $region5: #{_lambda_.1} parent=1 // pred_fallthru
      _
    // Predicated region
    $region6: #{_lambda_.1} parent=1 // pred_check
      _
    $region7: #{_lambda_.1} parent=1 // pred_check_branch
      %24 = sbr.rel (0) target = $region9
    $region8: #{_lambda_.1} parent=1 // pred_region
      %s26 = ssub.s32 32768, 32768
      %27 = vsyncadd [#allocation3], %s26
      %s28 = sshll.u32 [#allocation2], 4
      %s29 = int_to_ptr.vmem [resolvable:$true] %s28
      %34 = dma.hbm_to_vmem [thread:$0]  %s1, 32768, %s29, [#allocation3], 256, 256, 16
    $region9: #{_lambda_.1} parent=1 // pred_fallthru
      _
    // Predicated region
    $region10: #{_lambda_.1} parent=1 // pred_check
      _
    $region11: #{_lambda_.1} parent=1 // pred_check_branch
      %36 = sbr.rel (0) target = $region13
    $region12: #{_lambda_.1} parent=1 // pred_region
      _
    $region13: #{_lambda_.1} parent=1 // pred_fallthru
      _
    // Predicated region
    $region14: #{_lambda_.1} parent=1 // pred_check
      _
    $region15: #{_lambda_.1} parent=1 // pred_check_branch
      %38 = sbr.rel (0) target = $region17
    $region16: #{_lambda_.1} parent=1 // pred_region
      _
    $region17: #{_lambda_.1} parent=1 // pred_fallthru
      _
    // Predicated region
    $region18: #{_lambda_.1} parent=1 // pred_check
      _
    $region19: #{_lambda_.1} parent=1 // pred_check_branch
      %40 = sbr.rel (0) target = $region21
    $region20: #{_lambda_.1} parent=1 // pred_region
      _
    $region21: #{_lambda_.1} parent=1 // pred_fallthru
      _
    // Predicated region
    $region22: #{_lambda_.1} parent=1 // pred_check
      _
    $region23: #{_lambda_.1} parent=1 // pred_check_branch
      %42 = sbr.rel (0) target = $region25
    $region24: #{_lambda_.1} parent=1 // pred_region
      _
    $region25: #{_lambda_.1} parent=1 // pred_fallthru
      _
    // Predicated region
    $region26: #{_lambda_.1} parent=1 // pred_check
      _
    $region27: #{_lambda_.1} parent=1 // pred_check_branch
      %44 = sbr.rel (0) target = $region29
    $region28: #{_lambda_.1} parent=1 // pred_region
      _
    $region29: #{_lambda_.1} parent=1 // pred_fallthru
      _
    // Predicated region
    $region30: #{_lambda_.1} parent=1 // pred_check
      _
    $region31: #{_lambda_.1} parent=1 // pred_check_branch
      %46 = sbr.rel (0) target = $region33
    $region32: #{_lambda_.1} parent=1 // pred_region
      _
    $region33: #{_lambda_.1} parent=1 // pred_fallthru
      _
    // Predicated region
    $region34: #{_lambda_.1} parent=1 // pred_check
      _
    $region35: #{_lambda_.1} parent=1 // pred_check_branch
      %48 = sbr.rel (0) target = $region37
    $region36: #{_lambda_.1} parent=1 // pred_region
      %s50 = ssub.s32 8192, 8192
      %51 = vsyncadd [#allocation5], %s50
      %s52 = sshll.u32 [#allocation4], 4
      %s53 = int_to_ptr.vmem [resolvable:$true] %s52
      %58 = dma.hbm_to_vmem [thread:$0]  %s8, 8192, %s53, [#allocation5], 512, 512, 32
    $region37: #{_lambda_.1} parent=1 // pred_fallthru
      _
    // Predicated region
    $region38: #{_lambda_.1} parent=1 // pred_check
      _
    $region39: #{_lambda_.1} parent=1 // pred_check_branch
      %60 = sbr.rel (0) target = $region41
    $region40: #{_lambda_.1} parent=1 // pred_region
      _
    $region41: #{_lambda_.1} parent=1 // pred_fallthru
      _
    // Predicated region
    $region42: #{_lambda_.1} parent=1 // pred_check
      _
    $region43: #{_lambda_.1} parent=1 // pred_check_branch
      %62 = sbr.rel (0) target = $region45
    $region44: #{_lambda_.1} parent=1 // pred_region
      _
    $region45: #{_lambda_.1} parent=1 // pred_fallthru
      _
    // Predicated region
    $region46: #{_lambda_.1} parent=1 // pred_check
      _
    $region47: #{_lambda_.1} parent=1 // pred_check_branch
      %64 = sbr.rel (0) target = $region49
    $region48: #{_lambda_.1} parent=1 // pred_region
      _
    $region49: #{_lambda_.1} parent=1 // pred_fallthru
      _
    // Predicated region
    $region50: #{_lambda_.1} parent=1 // pred_check
      _
    $region51: #{_lambda_.1} parent=1 // pred_check_branch
      %66 = sbr.rel (0) target = $region53
    $region52: #{_lambda_.1} parent=1 // pred_region
      %67 = dma.done [#allocation3], 32768
    $region53: #{_lambda_.1} parent=1 // pred_fallthru
      _
    // Predicated region
    $region54: #{_lambda_.1} parent=1 // pred_check
      _
    $region55: #{_lambda_.1} parent=1 // pred_check_branch
      %69 = sbr.rel (0) target = $region57
    $region56: #{_lambda_.1} parent=1 // pred_region
      %70 = dma.done [#allocation5], 8192
    $region57: #{_lambda_.1} parent=1 // pred_fallthru
      _
    %v72 = vld [vmem:[%s0] sm:$0xff]
    %v73 = vld [vmem:[%s0 + $0x8] sm:$0xff]
    %v74 = vld [vmem:[%s0 + $0x10] sm:$0xff]
    %v75 = vld [vmem:[%s0 + $0x18] sm:$0xff]
    %v76 = vld [vmem:[#allocation2] sm:$0xff]
    %v77 = vld [vmem:[#allocation2 + $0x8] sm:$0xff]
    %v78 = vld [vmem:[#allocation2 + $0x10] sm:$0xff]
    %v79 = vld [vmem:[#allocation2 + $0x18] sm:$0xff]
    %v80 = vld [vmem:[#allocation2 + $0x20] sm:$0xff]
    %v81 = vld [vmem:[#allocation2 + $0x28] sm:$0xff]
    %v82 = vld [vmem:[#allocation2 + $0x30] sm:$0xff]
    %v83 = vld [vmem:[#allocation2 + $0x38] sm:$0xff]
    %v84 = vld [vmem:[#allocation2 + $0x40] sm:$0xff]
    %v85 = vld [vmem:[#allocation2 + $0x48] sm:$0xff]
    %v86 = vld [vmem:[#allocation2 + $0x50] sm:$0xff]
    %v87 = vld [vmem:[#allocation2 + $0x58] sm:$0xff]
    %v88 = vld [vmem:[#allocation2 + $0x60] sm:$0xff]
    %v89 = vld [vmem:[#allocation2 + $0x68] sm:$0xff]
    %v90 = vld [vmem:[#allocation2 + $0x70] sm:$0xff]
    %v91 = vld [vmem:[#allocation2 + $0x78] sm:$0xff]
    %v92 = vld [vmem:[#allocation2 + $0x80] sm:$0xff]
    %v93 = vld [vmem:[#allocation2 + $0x88] sm:$0xff]
    %v94 = vld [vmem:[#allocation2 + $0x90] sm:$0xff]
    %v95 = vld [vmem:[#allocation2 + $0x98] sm:$0xff]
    %v96 = vld [vmem:[#allocation2 + $0xa0] sm:$0xff]
    %v97 = vld [vmem:[#allocation2 + $0xa8] sm:$0xff]
    %v98 = vld [vmem:[#allocation2 + $0xb0] sm:$0xff]
    %v99 = vld [vmem:[#allocation2 + $0xb8] sm:$0xff]
    %v100 = vld [vmem:[#allocation2 + $0xc0] sm:$0xff]
    %v101 = vld [vmem:[#allocation2 + $0xc8] sm:$0xff]
    %v102 = vld [vmem:[#allocation2 + $0xd0] sm:$0xff]
    %v103 = vld [vmem:[#allocation2 + $0xd8] sm:$0xff]
    %v104 = vld [vmem:[#allocation2 + $0xe0] sm:$0xff]
    %v105 = vld [vmem:[#allocation2 + $0xe8] sm:$0xff]
    %v106 = vld [vmem:[#allocation2 + $0xf0] sm:$0xff]
    %v107 = vld [vmem:[#allocation2 + $0xf8] sm:$0xff]
    %v108 = vld [vmem:[#allocation2 + $0x100] sm:$0xff]
    %v109 = vld [vmem:[#allocation2 + $0x108] sm:$0xff]
    %v110 = vld [vmem:[#allocation2 + $0x110] sm:$0xff]
    %v111 = vld [vmem:[#allocation2 + $0x118] sm:$0xff]
    %v112 = vld [vmem:[#allocation2 + $0x120] sm:$0xff]
    %v113 = vld [vmem:[#allocation2 + $0x128] sm:$0xff]
    %v114 = vld [vmem:[#allocation2 + $0x130] sm:$0xff]
    %v115 = vld [vmem:[#allocation2 + $0x138] sm:$0xff]
    %v116 = vld [vmem:[#allocation2 + $0x140] sm:$0xff]
    %v117 = vld [vmem:[#allocation2 + $0x148] sm:$0xff]
    %v118 = vld [vmem:[#allocation2 + $0x150] sm:$0xff]
    %v119 = vld [vmem:[#allocation2 + $0x158] sm:$0xff]
    %v120 = vld [vmem:[#allocation2 + $0x160] sm:$0xff]
    %v121 = vld [vmem:[#allocation2 + $0x168] sm:$0xff]
    %v122 = vld [vmem:[#allocation2 + $0x170] sm:$0xff]
    %v123 = vld [vmem:[#allocation2 + $0x178] sm:$0xff]
    %v124 = vld [vmem:[#allocation2 + $0x180] sm:$0xff]
    %v125 = vld [vmem:[#allocation2 + $0x188] sm:$0xff]
    %v126 = vld [vmem:[#allocation2 + $0x190] sm:$0xff]
    %v127 = vld [vmem:[#allocation2 + $0x198] sm:$0xff]
    %v128 = vld [vmem:[#allocation2 + $0x1a0] sm:$0xff]
    %v129 = vld [vmem:[#allocation2 + $0x1a8] sm:$0xff]
    %v130 = vld [vmem:[#allocation2 + $0x1b0] sm:$0xff]
    %v131 = vld [vmem:[#allocation2 + $0x1b8] sm:$0xff]
    %v132 = vld [vmem:[#allocation2 + $0x1c0] sm:$0xff]
    %v133 = vld [vmem:[#allocation2 + $0x1c8] sm:$0xff]
    %v134 = vld [vmem:[#allocation2 + $0x1d0] sm:$0xff]
    %v135 = vld [vmem:[#allocation2 + $0x1d8] sm:$0xff]
    %v136 = vld [vmem:[#allocation2 + $0x1e0] sm:$0xff]
    %v137 = vld [vmem:[#allocation2 + $0x1e8] sm:$0xff]
    %v138 = vld [vmem:[#allocation2 + $0x1f0] sm:$0xff]
    %v139 = vld [vmem:[#allocation2 + $0x1f8] sm:$0xff]
    %v140 = vld [vmem:[#allocation2 + $0x200] sm:$0xff]
    %v141 = vld [vmem:[#allocation2 + $0x208] sm:$0xff]
    %v142 = vld [vmem:[#allocation2 + $0x210] sm:$0xff]
    %v143 = vld [vmem:[#allocation2 + $0x218] sm:$0xff]
    %v144 = vld [vmem:[#allocation2 + $0x220] sm:$0xff]
    %v145 = vld [vmem:[#allocation2 + $0x228] sm:$0xff]
    %v146 = vld [vmem:[#allocation2 + $0x230] sm:$0xff]
    %v147 = vld [vmem:[#allocation2 + $0x238] sm:$0xff]
    %v148 = vld [vmem:[#allocation2 + $0x240] sm:$0xff]
    %v149 = vld [vmem:[#allocation2 + $0x248] sm:$0xff]
    %v150 = vld [vmem:[#allocation2 + $0x250] sm:$0xff]
    %v151 = vld [vmem:[#allocation2 + $0x258] sm:$0xff]
    %v152 = vld [vmem:[#allocation2 + $0x260] sm:$0xff]
    %v153 = vld [vmem:[#allocation2 + $0x268] sm:$0xff]
    %v154 = vld [vmem:[#allocation2 + $0x270] sm:$0xff]
    %v155 = vld [vmem:[#allocation2 + $0x278] sm:$0xff]
    %v156 = vld [vmem:[#allocation2 + $0x280] sm:$0xff]
    %v157 = vld [vmem:[#allocation2 + $0x288] sm:$0xff]
    %v158 = vld [vmem:[#allocation2 + $0x290] sm:$0xff]
    %v159 = vld [vmem:[#allocation2 + $0x298] sm:$0xff]
    %v160 = vld [vmem:[#allocation2 + $0x2a0] sm:$0xff]
    %v161 = vld [vmem:[#allocation2 + $0x2a8] sm:$0xff]
    %v162 = vld [vmem:[#allocation2 + $0x2b0] sm:$0xff]
    %v163 = vld [vmem:[#allocation2 + $0x2b8] sm:$0xff]
    %v164 = vld [vmem:[#allocation2 + $0x2c0] sm:$0xff]
    %v165 = vld [vmem:[#allocation2 + $0x2c8] sm:$0xff]
    %v166 = vld [vmem:[#allocation2 + $0x2d0] sm:$0xff]
    %v167 = vld [vmem:[#allocation2 + $0x2d8] sm:$0xff]
    %v168 = vld [vmem:[#allocation2 + $0x2e0] sm:$0xff]
    %v169 = vld [vmem:[#allocation2 + $0x2e8] sm:$0xff]
    %v170 = vld [vmem:[#allocation2 + $0x2f0] sm:$0xff]
    %v171 = vld [vmem:[#allocation2 + $0x2f8] sm:$0xff]
    %v172 = vld [vmem:[#allocation2 + $0x300] sm:$0xff]
    %v173 = vld [vmem:[#allocation2 + $0x308] sm:$0xff]
    %v174 = vld [vmem:[#allocation2 + $0x310] sm:$0xff]
    %v175 = vld [vmem:[#allocation2 + $0x318] sm:$0xff]
    %v176 = vld [vmem:[#allocation2 + $0x320] sm:$0xff]
    %v177 = vld [vmem:[#allocation2 + $0x328] sm:$0xff]
    %v178 = vld [vmem:[#allocation2 + $0x330] sm:$0xff]
    %v179 = vld [vmem:[#allocation2 + $0x338] sm:$0xff]
    %v180 = vld [vmem:[#allocation2 + $0x340] sm:$0xff]
    %v181 = vld [vmem:[#allocation2 + $0x348] sm:$0xff]
    %v182 = vld [vmem:[#allocation2 + $0x350] sm:$0xff]
    %v183 = vld [vmem:[#allocation2 + $0x358] sm:$0xff]
    %v184 = vld [vmem:[#allocation2 + $0x360] sm:$0xff]
    %v185 = vld [vmem:[#allocation2 + $0x368] sm:$0xff]
    %v186 = vld [vmem:[#allocation2 + $0x370] sm:$0xff]
    %v187 = vld [vmem:[#allocation2 + $0x378] sm:$0xff]
    %v188 = vld [vmem:[#allocation2 + $0x380] sm:$0xff]
    %v189 = vld [vmem:[#allocation2 + $0x388] sm:$0xff]
    %v190 = vld [vmem:[#allocation2 + $0x390] sm:$0xff]
    %v191 = vld [vmem:[#allocation2 + $0x398] sm:$0xff]
    %v192 = vld [vmem:[#allocation2 + $0x3a0] sm:$0xff]
    %v193 = vld [vmem:[#allocation2 + $0x3a8] sm:$0xff]
    %v194 = vld [vmem:[#allocation2 + $0x3b0] sm:$0xff]
    %v195 = vld [vmem:[#allocation2 + $0x3b8] sm:$0xff]
    %v196 = vld [vmem:[#allocation2 + $0x3c0] sm:$0xff]
    %v197 = vld [vmem:[#allocation2 + $0x3c8] sm:$0xff]
    %v198 = vld [vmem:[#allocation2 + $0x3d0] sm:$0xff]
    %v199 = vld [vmem:[#allocation2 + $0x3d8] sm:$0xff]
    %v200 = vld [vmem:[#allocation2 + $0x3e0] sm:$0xff]
    %v201 = vld [vmem:[#allocation2 + $0x3e8] sm:$0xff]
    %v202 = vld [vmem:[#allocation2 + $0x3f0] sm:$0xff]
    %v203 = vld [vmem:[#allocation2 + $0x3f8] sm:$0xff]
    %v204 = vld [vmem:[#allocation2 + $0x400] sm:$0xff]
    %v205 = vld [vmem:[#allocation2 + $0x408] sm:$0xff]
    %v206 = vld [vmem:[#allocation2 + $0x410] sm:$0xff]
    %v207 = vld [vmem:[#allocation2 + $0x418] sm:$0xff]
    %v208 = vld [vmem:[#allocation2 + $0x420] sm:$0xff]
    %v209 = vld [vmem:[#allocation2 + $0x428] sm:$0xff]
    %v210 = vld [vmem:[#allocation2 + $0x430] sm:$0xff]
    %v211 = vld [vmem:[#allocation2 + $0x438] sm:$0xff]
    %v212 = vld [vmem:[#allocation2 + $0x440] sm:$0xff]
    %v213 = vld [vmem:[#allocation2 + $0x448] sm:$0xff]
    %v214 = vld [vmem:[#allocation2 + $0x450] sm:$0xff]
    %v215 = vld [vmem:[#allocation2 + $0x458] sm:$0xff]
    %v216 = vld [vmem:[#allocation2 + $0x460] sm:$0xff]
    %v217 = vld [vmem:[#allocation2 + $0x468] sm:$0xff]
    %v218 = vld [vmem:[#allocation2 + $0x470] sm:$0xff]
    %v219 = vld [vmem:[#allocation2 + $0x478] sm:$0xff]
    %v220 = vld [vmem:[#allocation2 + $0x480] sm:$0xff]
    %v221 = vld [vmem:[#allocation2 + $0x488] sm:$0xff]
    %v222 = vld [vmem:[#allocation2 + $0x490] sm:$0xff]
    %v223 = vld [vmem:[#allocation2 + $0x498] sm:$0xff]
    %v224 = vld [vmem:[#allocation2 + $0x4a0] sm:$0xff]
    %v225 = vld [vmem:[#allocation2 + $0x4a8] sm:$0xff]
    %v226 = vld [vmem:[#allocation2 + $0x4b0] sm:$0xff]
    %v227 = vld [vmem:[#allocation2 + $0x4b8] sm:$0xff]
    %v228 = vld [vmem:[#allocation2 + $0x4c0] sm:$0xff]
    %v229 = vld [vmem:[#allocation2 + $0x4c8] sm:$0xff]
    %v230 = vld [vmem:[#allocation2 + $0x4d0] sm:$0xff]
    %v231 = vld [vmem:[#allocation2 + $0x4d8] sm:$0xff]
    %v232 = vld [vmem:[#allocation2 + $0x4e0] sm:$0xff]
    %v233 = vld [vmem:[#allocation2 + $0x4e8] sm:$0xff]
    %v234 = vld [vmem:[#allocation2 + $0x4f0] sm:$0xff]
    %v235 = vld [vmem:[#allocation2 + $0x4f8] sm:$0xff]
    %v236 = vld [vmem:[#allocation2 + $0x500] sm:$0xff]
    %v237 = vld [vmem:[#allocation2 + $0x508] sm:$0xff]
    %v238 = vld [vmem:[#allocation2 + $0x510] sm:$0xff]
    %v239 = vld [vmem:[#allocation2 + $0x518] sm:$0xff]
    %v240 = vld [vmem:[#allocation2 + $0x520] sm:$0xff]
    %v241 = vld [vmem:[#allocation2 + $0x528] sm:$0xff]
    %v242 = vld [vmem:[#allocation2 + $0x530] sm:$0xff]
    %v243 = vld [vmem:[#allocation2 + $0x538] sm:$0xff]
    %v244 = vld [vmem:[#allocation2 + $0x540] sm:$0xff]
    %v245 = vld [vmem:[#allocation2 + $0x548] sm:$0xff]
    %v246 = vld [vmem:[#allocation2 + $0x550] sm:$0xff]
    %v247 = vld [vmem:[#allocation2 + $0x558] sm:$0xff]
    %v248 = vld [vmem:[#allocation2 + $0x560] sm:$0xff]
    %v249 = vld [vmem:[#allocation2 + $0x568] sm:$0xff]
    %v250 = vld [vmem:[#allocation2 + $0x570] sm:$0xff]
    %v251 = vld [vmem:[#allocation2 + $0x578] sm:$0xff]
    %v252 = vld [vmem:[#allocation2 + $0x580] sm:$0xff]
    %v253 = vld [vmem:[#allocation2 + $0x588] sm:$0xff]
    %v254 = vld [vmem:[#allocation2 + $0x590] sm:$0xff]
    %v255 = vld [vmem:[#allocation2 + $0x598] sm:$0xff]
    %v256 = vld [vmem:[#allocation2 + $0x5a0] sm:$0xff]
    %v257 = vld [vmem:[#allocation2 + $0x5a8] sm:$0xff]
    %v258 = vld [vmem:[#allocation2 + $0x5b0] sm:$0xff]
    %v259 = vld [vmem:[#allocation2 + $0x5b8] sm:$0xff]
    %v260 = vld [vmem:[#allocation2 + $0x5c0] sm:$0xff]
    %v261 = vld [vmem:[#allocation2 + $0x5c8] sm:$0xff]
    %v262 = vld [vmem:[#allocation2 + $0x5d0] sm:$0xff]
    %v263 = vld [vmem:[#allocation2 + $0x5d8] sm:$0xff]
    %v264 = vld [vmem:[#allocation2 + $0x5e0] sm:$0xff]
    %v265 = vld [vmem:[#allocation2 + $0x5e8] sm:$0xff]
    %v266 = vld [vmem:[#allocation2 + $0x5f0] sm:$0xff]
    %v267 = vld [vmem:[#allocation2 + $0x5f8] sm:$0xff]
    %v268 = vld [vmem:[#allocation2 + $0x600] sm:$0xff]
    %v269 = vld [vmem:[#allocation2 + $0x608] sm:$0xff]
    %v270 = vld [vmem:[#allocation2 + $0x610] sm:$0xff]
    %v271 = vld [vmem:[#allocation2 + $0x618] sm:$0xff]
    %v272 = vld [vmem:[#allocation2 + $0x620] sm:$0xff]
    %v273 = vld [vmem:[#allocation2 + $0x628] sm:$0xff]
    %v274 = vld [vmem:[#allocation2 + $0x630] sm:$0xff]
    %v275 = vld [vmem:[#allocation2 + $0x638] sm:$0xff]
    %v276 = vld [vmem:[#allocation2 + $0x640] sm:$0xff]
    %v277 = vld [vmem:[#allocation2 + $0x648] sm:$0xff]
    %v278 = vld [vmem:[#allocation2 + $0x650] sm:$0xff]
    %v279 = vld [vmem:[#allocation2 + $0x658] sm:$0xff]
    %v280 = vld [vmem:[#allocation2 + $0x660] sm:$0xff]
    %v281 = vld [vmem:[#allocation2 + $0x668] sm:$0xff]
    %v282 = vld [vmem:[#allocation2 + $0x670] sm:$0xff]
    %v283 = vld [vmem:[#allocation2 + $0x678] sm:$0xff]
    %v284 = vld [vmem:[#allocation2 + $0x680] sm:$0xff]
    %v285 = vld [vmem:[#allocation2 + $0x688] sm:$0xff]
    %v286 = vld [vmem:[#allocation2 + $0x690] sm:$0xff]
    %v287 = vld [vmem:[#allocation2 + $0x698] sm:$0xff]
    %v288 = vld [vmem:[#allocation2 + $0x6a0] sm:$0xff]
    %v289 = vld [vmem:[#allocation2 + $0x6a8] sm:$0xff]
    %v290 = vld [vmem:[#allocation2 + $0x6b0] sm:$0xff]
    %v291 = vld [vmem:[#allocation2 + $0x6b8] sm:$0xff]
    %v292 = vld [vmem:[#allocation2 + $0x6c0] sm:$0xff]
    %v293 = vld [vmem:[#allocation2 + $0x6c8] sm:$0xff]
    %v294 = vld [vmem:[#allocation2 + $0x6d0] sm:$0xff]
    %v295 = vld [vmem:[#allocation2 + $0x6d8] sm:$0xff]
    %v296 = vld [vmem:[#allocation2 + $0x6e0] sm:$0xff]
    %v297 = vld [vmem:[#allocation2 + $0x6e8] sm:$0xff]
    %v298 = vld [vmem:[#allocation2 + $0x6f0] sm:$0xff]
    %v299 = vld [vmem:[#allocation2 + $0x6f8] sm:$0xff]
    %v300 = vld [vmem:[#allocation2 + $0x700] sm:$0xff]
    %v301 = vld [vmem:[#allocation2 + $0x708] sm:$0xff]
    %v302 = vld [vmem:[#allocation2 + $0x710] sm:$0xff]
    %v303 = vld [vmem:[#allocation2 + $0x718] sm:$0xff]
    %v304 = vld [vmem:[#allocation2 + $0x720] sm:$0xff]
    %v305 = vld [vmem:[#allocation2 + $0x728] sm:$0xff]
    %v306 = vld [vmem:[#allocation2 + $0x730] sm:$0xff]
    %v307 = vld [vmem:[#allocation2 + $0x738] sm:$0xff]
    %v308 = vld [vmem:[#allocation2 + $0x740] sm:$0xff]
    %v309 = vld [vmem:[#allocation2 + $0x748] sm:$0xff]
    %v310 = vld [vmem:[#allocation2 + $0x750] sm:$0xff]
    %v311 = vld [vmem:[#allocation2 + $0x758] sm:$0xff]
    %v312 = vld [vmem:[#allocation2 + $0x760] sm:$0xff]
    %v313 = vld [vmem:[#allocation2 + $0x768] sm:$0xff]
    %v314 = vld [vmem:[#allocation2 + $0x770] sm:$0xff]
    %v315 = vld [vmem:[#allocation2 + $0x778] sm:$0xff]
    %v316 = vld [vmem:[#allocation2 + $0x780] sm:$0xff]
    %v317 = vld [vmem:[#allocation2 + $0x788] sm:$0xff]
    %v318 = vld [vmem:[#allocation2 + $0x790] sm:$0xff]
    %v319 = vld [vmem:[#allocation2 + $0x798] sm:$0xff]
    %v320 = vld [vmem:[#allocation2 + $0x7a0] sm:$0xff]
    %v321 = vld [vmem:[#allocation2 + $0x7a8] sm:$0xff]
    %v322 = vld [vmem:[#allocation2 + $0x7b0] sm:$0xff]
    %v323 = vld [vmem:[#allocation2 + $0x7b8] sm:$0xff]
    %v324 = vld [vmem:[#allocation2 + $0x7c0] sm:$0xff]
    %v325 = vld [vmem:[#allocation2 + $0x7c8] sm:$0xff]
    %v326 = vld [vmem:[#allocation2 + $0x7d0] sm:$0xff]
    %v327 = vld [vmem:[#allocation2 + $0x7d8] sm:$0xff]
    %v328 = vld [vmem:[#allocation2 + $0x7e0] sm:$0xff]
    %v329 = vld [vmem:[#allocation2 + $0x7e8] sm:$0xff]
    %v330 = vld [vmem:[#allocation2 + $0x7f0] sm:$0xff]
    %v331 = vld [vmem:[#allocation2 + $0x7f8] sm:$0xff]
    %v332 = vld [vmem:[%s2] sm:$0xf]
    %v334 = vlaneseq
    %v335 = vshrl.u32 %v334, 7
    %v336 = vsub.s32 0, %v335
    %v337 = vrot.slane %v332, %v336
    %v338 = vlaneseq
    %v339 = vshrl.u32 %v338, 7
    %v340 = vsub.s32 1, %v339
    %v341 = vrot.slane %v332, %v340
    %v342 = vlaneseq
    %v343 = vshrl.u32 %v342, 7
    %v344 = vsub.s32 2, %v343
    %v345 = vrot.slane %v332, %v344
    %v346 = vlaneseq
    %v347 = vshrl.u32 %v346, 7
    %v348 = vsub.s32 3, %v347
    %v349 = vrot.slane %v332, %v348
    %v358 = vunpack.c.l.b16 %v72
    %v359 = vunpack.c.h.b16 %v72
    %v360 = vunpack.c.l.b16 %v73
    %v361 = vunpack.c.h.b16 %v73
    %v362 = vunpack.c.l.b16 %v74
    %v363 = vunpack.c.h.b16 %v74
    %v364 = vunpack.c.l.b16 %v75
    %v365 = vunpack.c.h.b16 %v75
    %v366 = vpack.c.b16 %v358, %v358
    %v367 = vpack.c.b16 %v359, %v359
    %v368 = vpack.c.b16 %v360, %v360
    %v369 = vpack.c.b16 %v361, %v361
    %v370 = vpack.c.b16 %v362, %v362
    %v371 = vpack.c.b16 %v363, %v363
    %v372 = vpack.c.b16 %v364, %v364
    %v373 = vpack.c.b16 %v365, %v365
    %v638 = vunpack.c.l.b16 %v76
    %v639 = vunpack.c.h.b16 %v76
    %v640 = vunpack.c.l.b16 %v77
    %v641 = vunpack.c.h.b16 %v77
    %v642 = vunpack.c.l.b16 %v78
    %v643 = vunpack.c.h.b16 %v78
    %v644 = vunpack.c.l.b16 %v79
    %v645 = vunpack.c.h.b16 %v79
    %v646 = vunpack.c.l.b16 %v80
    %v647 = vunpack.c.h.b16 %v80
    %v648 = vunpack.c.l.b16 %v81
    %v649 = vunpack.c.h.b16 %v81
    %v650 = vunpack.c.l.b16 %v82
    %v651 = vunpack.c.h.b16 %v82
    %v652 = vunpack.c.l.b16 %v83
    %v653 = vunpack.c.h.b16 %v83
    %v654 = vunpack.c.l.b16 %v84
    %v655 = vunpack.c.h.b16 %v84
    %v656 = vunpack.c.l.b16 %v85
    %v657 = vunpack.c.h.b16 %v85
    %v658 = vunpack.c.l.b16 %v86
    %v659 = vunpack.c.h.b16 %v86
    %v660 = vunpack.c.l.b16 %v87
    %v661 = vunpack.c.h.b16 %v87
    %v662 = vunpack.c.l.b16 %v88
    %v663 = vunpack.c.h.b16 %v88
    %v664 = vunpack.c.l.b16 %v89
    %v665 = vunpack.c.h.b16 %v89
    %v666 = vunpack.c.l.b16 %v90
    %v667 = vunpack.c.h.b16 %v90
    %v668 = vunpack.c.l.b16 %v91
    %v669 = vunpack.c.h.b16 %v91
    %v670 = vunpack.c.l.b16 %v92
    %v671 = vunpack.c.h.b16 %v92
    %v672 = vunpack.c.l.b16 %v93
    %v673 = vunpack.c.h.b16 %v93
    %v674 = vunpack.c.l.b16 %v94
    %v675 = vunpack.c.h.b16 %v94
    %v676 = vunpack.c.l.b16 %v95
    %v677 = vunpack.c.h.b16 %v95
    %v678 = vunpack.c.l.b16 %v96
    %v679 = vunpack.c.h.b16 %v96
    %v680 = vunpack.c.l.b16 %v97
    %v681 = vunpack.c.h.b16 %v97
    %v682 = vunpack.c.l.b16 %v98
    %v683 = vunpack.c.h.b16 %v98
    %v684 = vunpack.c.l.b16 %v99
    %v685 = vunpack.c.h.b16 %v99
    %v686 = vunpack.c.l.b16 %v100
    %v687 = vunpack.c.h.b16 %v100
    %v688 = vunpack.c.l.b16 %v101
    %v689 = vunpack.c.h.b16 %v101
    %v690 = vunpack.c.l.b16 %v102
    %v691 = vunpack.c.h.b16 %v102
    %v692 = vunpack.c.l.b16 %v103
    %v693 = vunpack.c.h.b16 %v103
    %v694 = vunpack.c.l.b16 %v104
    %v695 = vunpack.c.h.b16 %v104
    %v696 = vunpack.c.l.b16 %v105
    %v697 = vunpack.c.h.b16 %v105
    %v698 = vunpack.c.l.b16 %v106
    %v699 = vunpack.c.h.b16 %v106
    %v700 = vunpack.c.l.b16 %v107
    %v701 = vunpack.c.h.b16 %v107
    %v702 = vunpack.c.l.b16 %v108
    %v703 = vunpack.c.h.b16 %v108
    %v704 = vunpack.c.l.b16 %v109
    %v705 = vunpack.c.h.b16 %v109
    %v706 = vunpack.c.l.b16 %v110
    %v707 = vunpack.c.h.b16 %v110
    %v708 = vunpack.c.l.b16 %v111
    %v709 = vunpack.c.h.b16 %v111
    %v710 = vunpack.c.l.b16 %v112
    %v711 = vunpack.c.h.b16 %v112
    %v712 = vunpack.c.l.b16 %v113
    %v713 = vunpack.c.h.b16 %v113
    %v714 = vunpack.c.l.b16 %v114
    %v715 = vunpack.c.h.b16 %v114
    %v716 = vunpack.c.l.b16 %v115
    %v717 = vunpack.c.h.b16 %v115
    %v718 = vunpack.c.l.b16 %v116
    %v719 = vunpack.c.h.b16 %v116
    %v720 = vunpack.c.l.b16 %v117
    %v721 = vunpack.c.h.b16 %v117
    %v722 = vunpack.c.l.b16 %v118
    %v723 = vunpack.c.h.b16 %v118
    %v724 = vunpack.c.l.b16 %v119
    %v725 = vunpack.c.h.b16 %v119
    %v726 = vunpack.c.l.b16 %v120
    %v727 = vunpack.c.h.b16 %v120
    %v728 = vunpack.c.l.b16 %v121
    %v729 = vunpack.c.h.b16 %v121
    %v730 = vunpack.c.l.b16 %v122
    %v731 = vunpack.c.h.b16 %v122
    %v732 = vunpack.c.l.b16 %v123
    %v733 = vunpack.c.h.b16 %v123
    %v734 = vunpack.c.l.b16 %v124
    %v735 = vunpack.c.h.b16 %v124
    %v736 = vunpack.c.l.b16 %v125
    %v737 = vunpack.c.h.b16 %v125
    %v738 = vunpack.c.l.b16 %v126
    %v739 = vunpack.c.h.b16 %v126
    %v740 = vunpack.c.l.b16 %v127
    %v741 = vunpack.c.h.b16 %v127
    %v742 = vunpack.c.l.b16 %v128
    %v743 = vunpack.c.h.b16 %v128
    %v744 = vunpack.c.l.b16 %v129
    %v745 = vunpack.c.h.b16 %v129
    %v746 = vunpack.c.l.b16 %v130
    %v747 = vunpack.c.h.b16 %v130
    %v748 = vunpack.c.l.b16 %v131
    %v749 = vunpack.c.h.b16 %v131
    %v750 = vunpack.c.l.b16 %v132
    %v751 = vunpack.c.h.b16 %v132
    %v752 = vunpack.c.l.b16 %v133
    %v753 = vunpack.c.h.b16 %v133
    %v754 = vunpack.c.l.b16 %v134
    %v755 = vunpack.c.h.b16 %v134
    %v756 = vunpack.c.l.b16 %v135
    %v757 = vunpack.c.h.b16 %v135
    %v758 = vunpack.c.l.b16 %v136
    %v759 = vunpack.c.h.b16 %v136
    %v760 = vunpack.c.l.b16 %v137
    %v761 = vunpack.c.h.b16 %v137
    %v762 = vunpack.c.l.b16 %v138
    %v763 = vunpack.c.h.b16 %v138
    %v764 = vunpack.c.l.b16 %v139
    %v765 = vunpack.c.h.b16 %v139
    %v766 = vunpack.c.l.b16 %v140
    %v767 = vunpack.c.h.b16 %v140
    %v768 = vunpack.c.l.b16 %v141
    %v769 = vunpack.c.h.b16 %v141
    %v770 = vunpack.c.l.b16 %v142
    %v771 = vunpack.c.h.b16 %v142
    %v772 = vunpack.c.l.b16 %v143
    %v773 = vunpack.c.h.b16 %v143
    %v774 = vunpack.c.l.b16 %v144
    %v775 = vunpack.c.h.b16 %v144
    %v776 = vunpack.c.l.b16 %v145
    %v777 = vunpack.c.h.b16 %v145
    %v778 = vunpack.c.l.b16 %v146
    %v779 = vunpack.c.h.b16 %v146
    %v780 = vunpack.c.l.b16 %v147
    %v781 = vunpack.c.h.b16 %v147
    %v782 = vunpack.c.l.b16 %v148
    %v783 = vunpack.c.h.b16 %v148
    %v784 = vunpack.c.l.b16 %v149
    %v785 = vunpack.c.h.b16 %v149
    %v786 = vunpack.c.l.b16 %v150
    %v787 = vunpack.c.h.b16 %v150
    %v788 = vunpack.c.l.b16 %v151
    %v789 = vunpack.c.h.b16 %v151
    %v790 = vunpack.c.l.b16 %v152
    %v791 = vunpack.c.h.b16 %v152
    %v792 = vunpack.c.l.b16 %v153
    %v793 = vunpack.c.h.b16 %v153
    %v794 = vunpack.c.l.b16 %v154
    %v795 = vunpack.c.h.b16 %v154
    %v796 = vunpack.c.l.b16 %v155
    %v797 = vunpack.c.h.b16 %v155
    %v798 = vunpack.c.l.b16 %v156
    %v799 = vunpack.c.h.b16 %v156
    %v800 = vunpack.c.l.b16 %v157
    %v801 = vunpack.c.h.b16 %v157
    %v802 = vunpack.c.l.b16 %v158
    %v803 = vunpack.c.h.b16 %v158
    %v804 = vunpack.c.l.b16 %v159
    %v805 = vunpack.c.h.b16 %v159
    %v806 = vunpack.c.l.b16 %v160
    %v807 = vunpack.c.h.b16 %v160
    %v808 = vunpack.c.l.b16 %v161
    %v809 = vunpack.c.h.b16 %v161
    %v810 = vunpack.c.l.b16 %v162
    %v811 = vunpack.c.h.b16 %v162
    %v812 = vunpack.c.l.b16 %v163
    %v813 = vunpack.c.h.b16 %v163
    %v814 = vunpack.c.l.b16 %v164
    %v815 = vunpack.c.h.b16 %v164
    %v816 = vunpack.c.l.b16 %v165
    %v817 = vunpack.c.h.b16 %v165
    %v818 = vunpack.c.l.b16 %v166
    %v819 = vunpack.c.h.b16 %v166
    %v820 = vunpack.c.l.b16 %v167
    %v821 = vunpack.c.h.b16 %v167
    %v822 = vunpack.c.l.b16 %v168
    %v823 = vunpack.c.h.b16 %v168
    %v824 = vunpack.c.l.b16 %v169
    %v825 = vunpack.c.h.b16 %v169
    %v826 = vunpack.c.l.b16 %v170
    %v827 = vunpack.c.h.b16 %v170
    %v828 = vunpack.c.l.b16 %v171
    %v829 = vunpack.c.h.b16 %v171
    %v830 = vunpack.c.l.b16 %v172
    %v831 = vunpack.c.h.b16 %v172
    %v832 = vunpack.c.l.b16 %v173
    %v833 = vunpack.c.h.b16 %v173
    %v834 = vunpack.c.l.b16 %v174
    %v835 = vunpack.c.h.b16 %v174
    %v836 = vunpack.c.l.b16 %v175
    %v837 = vunpack.c.h.b16 %v175
    %v838 = vunpack.c.l.b16 %v176
    %v839 = vunpack.c.h.b16 %v176
    %v840 = vunpack.c.l.b16 %v177
    %v841 = vunpack.c.h.b16 %v177
    %v842 = vunpack.c.l.b16 %v178
    %v843 = vunpack.c.h.b16 %v178
    %v844 = vunpack.c.l.b16 %v179
    %v845 = vunpack.c.h.b16 %v179
    %v846 = vunpack.c.l.b16 %v180
    %v847 = vunpack.c.h.b16 %v180
    %v848 = vunpack.c.l.b16 %v181
    %v849 = vunpack.c.h.b16 %v181
    %v850 = vunpack.c.l.b16 %v182
    %v851 = vunpack.c.h.b16 %v182
    %v852 = vunpack.c.l.b16 %v183
    %v853 = vunpack.c.h.b16 %v183
    %v854 = vunpack.c.l.b16 %v184
    %v855 = vunpack.c.h.b16 %v184
    %v856 = vunpack.c.l.b16 %v185
    %v857 = vunpack.c.h.b16 %v185
    %v858 = vunpack.c.l.b16 %v186
    %v859 = vunpack.c.h.b16 %v186
    %v860 = vunpack.c.l.b16 %v187
    %v861 = vunpack.c.h.b16 %v187
    %v862 = vunpack.c.l.b16 %v188
    %v863 = vunpack.c.h.b16 %v188
    %v864 = vunpack.c.l.b16 %v189
    %v865 = vunpack.c.h.b16 %v189
    %v866 = vunpack.c.l.b16 %v190
    %v867 = vunpack.c.h.b16 %v190
    %v868 = vunpack.c.l.b16 %v191
    %v869 = vunpack.c.h.b16 %v191
    %v870 = vunpack.c.l.b16 %v192
    %v871 = vunpack.c.h.b16 %v192
    %v872 = vunpack.c.l.b16 %v193
    %v873 = vunpack.c.h.b16 %v193
    %v874 = vunpack.c.l.b16 %v194
    %v875 = vunpack.c.h.b16 %v194
    %v876 = vunpack.c.l.b16 %v195
    %v877 = vunpack.c.h.b16 %v195
    %v878 = vunpack.c.l.b16 %v196
    %v879 = vunpack.c.h.b16 %v196
    %v880 = vunpack.c.l.b16 %v197
    %v881 = vunpack.c.h.b16 %v197
    %v882 = vunpack.c.l.b16 %v198
    %v883 = vunpack.c.h.b16 %v198
    %v884 = vunpack.c.l.b16 %v199
    %v885 = vunpack.c.h.b16 %v199
    %v886 = vunpack.c.l.b16 %v200
    %v887 = vunpack.c.h.b16 %v200
    %v888 = vunpack.c.l.b16 %v201
    %v889 = vunpack.c.h.b16 %v201
    %v890 = vunpack.c.l.b16 %v202
    %v891 = vunpack.c.h.b16 %v202
    %v892 = vunpack.c.l.b16 %v203
    %v893 = vunpack.c.h.b16 %v203
    %v894 = vunpack.c.l.b16 %v204
    %v895 = vunpack.c.h.b16 %v204
    %v896 = vunpack.c.l.b16 %v205
    %v897 = vunpack.c.h.b16 %v205
    %v898 = vunpack.c.l.b16 %v206
    %v899 = vunpack.c.h.b16 %v206
    %v900 = vunpack.c.l.b16 %v207
    %v901 = vunpack.c.h.b16 %v207
    %v902 = vunpack.c.l.b16 %v208
    %v903 = vunpack.c.h.b16 %v208
    %v904 = vunpack.c.l.b16 %v209
    %v905 = vunpack.c.h.b16 %v209
    %v906 = vunpack.c.l.b16 %v210
    %v907 = vunpack.c.h.b16 %v210
    %v908 = vunpack.c.l.b16 %v211
    %v909 = vunpack.c.h.b16 %v211
    %v910 = vunpack.c.l.b16 %v212
    %v911 = vunpack.c.h.b16 %v212
    %v912 = vunpack.c.l.b16 %v213
    %v913 = vunpack.c.h.b16 %v213
    %v914 = vunpack.c.l.b16 %v214
    %v915 = vunpack.c.h.b16 %v214
    %v916 = vunpack.c.l.b16 %v215
    %v917 = vunpack.c.h.b16 %v215
    %v918 = vunpack.c.l.b16 %v216
    %v919 = vunpack.c.h.b16 %v216
    %v920 = vunpack.c.l.b16 %v217
    %v921 = vunpack.c.h.b16 %v217
    %v922 = vunpack.c.l.b16 %v218
    %v923 = vunpack.c.h.b16 %v218
    %v924 = vunpack.c.l.b16 %v219
    %v925 = vunpack.c.h.b16 %v219
    %v926 = vunpack.c.l.b16 %v220
    %v927 = vunpack.c.h.b16 %v220
    %v928 = vunpack.c.l.b16 %v221
    %v929 = vunpack.c.h.b16 %v221
    %v930 = vunpack.c.l.b16 %v222
    %v931 = vunpack.c.h.b16 %v222
    %v932 = vunpack.c.l.b16 %v223
    %v933 = vunpack.c.h.b16 %v223
    %v934 = vunpack.c.l.b16 %v224
    %v935 = vunpack.c.h.b16 %v224
    %v936 = vunpack.c.l.b16 %v225
    %v937 = vunpack.c.h.b16 %v225
    %v938 = vunpack.c.l.b16 %v226
    %v939 = vunpack.c.h.b16 %v226
    %v940 = vunpack.c.l.b16 %v227
    %v941 = vunpack.c.h.b16 %v227
    %v942 = vunpack.c.l.b16 %v228
    %v943 = vunpack.c.h.b16 %v228
    %v944 = vunpack.c.l.b16 %v229
    %v945 = vunpack.c.h.b16 %v229
    %v946 = vunpack.c.l.b16 %v230
    %v947 = vunpack.c.h.b16 %v230
    %v948 = vunpack.c.l.b16 %v231
    %v949 = vunpack.c.h.b16 %v231
    %v950 = vunpack.c.l.b16 %v232
    %v951 = vunpack.c.h.b16 %v232
    %v952 = vunpack.c.l.b16 %v233
    %v953 = vunpack.c.h.b16 %v233
    %v954 = vunpack.c.l.b16 %v234
    %v955 = vunpack.c.h.b16 %v234
    %v956 = vunpack.c.l.b16 %v235
    %v957 = vunpack.c.h.b16 %v235
    %v958 = vunpack.c.l.b16 %v236
    %v959 = vunpack.c.h.b16 %v236
    %v960 = vunpack.c.l.b16 %v237
    %v961 = vunpack.c.h.b16 %v237
    %v962 = vunpack.c.l.b16 %v238
    %v963 = vunpack.c.h.b16 %v238
    %v964 = vunpack.c.l.b16 %v239
    %v965 = vunpack.c.h.b16 %v239
    %v966 = vunpack.c.l.b16 %v240
    %v967 = vunpack.c.h.b16 %v240
    %v968 = vunpack.c.l.b16 %v241
    %v969 = vunpack.c.h.b16 %v241
    %v970 = vunpack.c.l.b16 %v242
    %v971 = vunpack.c.h.b16 %v242
    %v972 = vunpack.c.l.b16 %v243
    %v973 = vunpack.c.h.b16 %v243
    %v974 = vunpack.c.l.b16 %v244
    %v975 = vunpack.c.h.b16 %v244
    %v976 = vunpack.c.l.b16 %v245
    %v977 = vunpack.c.h.b16 %v245
    %v978 = vunpack.c.l.b16 %v246
    %v979 = vunpack.c.h.b16 %v246
    %v980 = vunpack.c.l.b16 %v247
    %v981 = vunpack.c.h.b16 %v247
    %v982 = vunpack.c.l.b16 %v248
    %v983 = vunpack.c.h.b16 %v248
    %v984 = vunpack.c.l.b16 %v249
    %v985 = vunpack.c.h.b16 %v249
    %v986 = vunpack.c.l.b16 %v250
    %v987 = vunpack.c.h.b16 %v250
    %v988 = vunpack.c.l.b16 %v251
    %v989 = vunpack.c.h.b16 %v251
    %v990 = vunpack.c.l.b16 %v252
    %v991 = vunpack.c.h.b16 %v252
    %v992 = vunpack.c.l.b16 %v253
    %v993 = vunpack.c.h.b16 %v253
    %v994 = vunpack.c.l.b16 %v254
    %v995 = vunpack.c.h.b16 %v254
    %v996 = vunpack.c.l.b16 %v255
    %v997 = vunpack.c.h.b16 %v255
    %v998 = vunpack.c.l.b16 %v256
    %v999 = vunpack.c.h.b16 %v256
    %v1000 = vunpack.c.l.b16 %v257
    %v1001 = vunpack.c.h.b16 %v257
    %v1002 = vunpack.c.l.b16 %v258
    %v1003 = vunpack.c.h.b16 %v258
    %v1004 = vunpack.c.l.b16 %v259
    %v1005 = vunpack.c.h.b16 %v259
    %v1006 = vunpack.c.l.b16 %v260
    %v1007 = vunpack.c.h.b16 %v260
    %v1008 = vunpack.c.l.b16 %v261
    %v1009 = vunpack.c.h.b16 %v261
    %v1010 = vunpack.c.l.b16 %v262
    %v1011 = vunpack.c.h.b16 %v262
    %v1012 = vunpack.c.l.b16 %v263
    %v1013 = vunpack.c.h.b16 %v263
    %v1014 = vunpack.c.l.b16 %v264
    %v1015 = vunpack.c.h.b16 %v264
    %v1016 = vunpack.c.l.b16 %v265
    %v1017 = vunpack.c.h.b16 %v265
    %v1018 = vunpack.c.l.b16 %v266
    %v1019 = vunpack.c.h.b16 %v266
    %v1020 = vunpack.c.l.b16 %v267
    %v1021 = vunpack.c.h.b16 %v267
    %v1022 = vunpack.c.l.b16 %v268
    %v1023 = vunpack.c.h.b16 %v268
    %v1024 = vunpack.c.l.b16 %v269
    %v1025 = vunpack.c.h.b16 %v269
    %v1026 = vunpack.c.l.b16 %v270
    %v1027 = vunpack.c.h.b16 %v270
    %v1028 = vunpack.c.l.b16 %v271
    %v1029 = vunpack.c.h.b16 %v271
    %v1030 = vunpack.c.l.b16 %v272
    %v1031 = vunpack.c.h.b16 %v272
    %v1032 = vunpack.c.l.b16 %v273
    %v1033 = vunpack.c.h.b16 %v273
    %v1034 = vunpack.c.l.b16 %v274
    %v1035 = vunpack.c.h.b16 %v274
    %v1036 = vunpack.c.l.b16 %v275
    %v1037 = vunpack.c.h.b16 %v275
    %v1038 = vunpack.c.l.b16 %v276
    %v1039 = vunpack.c.h.b16 %v276
    %v1040 = vunpack.c.l.b16 %v277
    %v1041 = vunpack.c.h.b16 %v277
    %v1042 = vunpack.c.l.b16 %v278
    %v1043 = vunpack.c.h.b16 %v278
    %v1044 = vunpack.c.l.b16 %v279
    %v1045 = vunpack.c.h.b16 %v279
    %v1046 = vunpack.c.l.b16 %v280
    %v1047 = vunpack.c.h.b16 %v280
    %v1048 = vunpack.c.l.b16 %v281
    %v1049 = vunpack.c.h.b16 %v281
    %v1050 = vunpack.c.l.b16 %v282
    %v1051 = vunpack.c.h.b16 %v282
    %v1052 = vunpack.c.l.b16 %v283
    %v1053 = vunpack.c.h.b16 %v283
    %v1054 = vunpack.c.l.b16 %v284
    %v1055 = vunpack.c.h.b16 %v284
    %v1056 = vunpack.c.l.b16 %v285
    %v1057 = vunpack.c.h.b16 %v285
    %v1058 = vunpack.c.l.b16 %v286
    %v1059 = vunpack.c.h.b16 %v286
    %v1060 = vunpack.c.l.b16 %v287
    %v1061 = vunpack.c.h.b16 %v287
    %v1062 = vunpack.c.l.b16 %v288
    %v1063 = vunpack.c.h.b16 %v288
    %v1064 = vunpack.c.l.b16 %v289
    %v1065 = vunpack.c.h.b16 %v289
    %v1066 = vunpack.c.l.b16 %v290
    %v1067 = vunpack.c.h.b16 %v290
    %v1068 = vunpack.c.l.b16 %v291
    %v1069 = vunpack.c.h.b16 %v291
    %v1070 = vunpack.c.l.b16 %v292
    %v1071 = vunpack.c.h.b16 %v292
    %v1072 = vunpack.c.l.b16 %v293
    %v1073 = vunpack.c.h.b16 %v293
    %v1074 = vunpack.c.l.b16 %v294
    %v1075 = vunpack.c.h.b16 %v294
    %v1076 = vunpack.c.l.b16 %v295
    %v1077 = vunpack.c.h.b16 %v295
    %v1078 = vunpack.c.l.b16 %v296
    %v1079 = vunpack.c.h.b16 %v296
    %v1080 = vunpack.c.l.b16 %v297
    %v1081 = vunpack.c.h.b16 %v297
    %v1082 = vunpack.c.l.b16 %v298
    %v1083 = vunpack.c.h.b16 %v298
    %v1084 = vunpack.c.l.b16 %v299
    %v1085 = vunpack.c.h.b16 %v299
    %v1086 = vunpack.c.l.b16 %v300
    %v1087 = vunpack.c.h.b16 %v300
    %v1088 = vunpack.c.l.b16 %v301
    %v1089 = vunpack.c.h.b16 %v301
    %v1090 = vunpack.c.l.b16 %v302
    %v1091 = vunpack.c.h.b16 %v302
    %v1092 = vunpack.c.l.b16 %v303
    %v1093 = vunpack.c.h.b16 %v303
    %v1094 = vunpack.c.l.b16 %v304
    %v1095 = vunpack.c.h.b16 %v304
    %v1096 = vunpack.c.l.b16 %v305
    %v1097 = vunpack.c.h.b16 %v305
    %v1098 = vunpack.c.l.b16 %v306
    %v1099 = vunpack.c.h.b16 %v306
    %v1100 = vunpack.c.l.b16 %v307
    %v1101 = vunpack.c.h.b16 %v307
    %v1102 = vunpack.c.l.b16 %v308
    %v1103 = vunpack.c.h.b16 %v308
    %v1104 = vunpack.c.l.b16 %v309
    %v1105 = vunpack.c.h.b16 %v309
    %v1106 = vunpack.c.l.b16 %v310
    %v1107 = vunpack.c.h.b16 %v310
    %v1108 = vunpack.c.l.b16 %v311
    %v1109 = vunpack.c.h.b16 %v311
    %v1110 = vunpack.c.l.b16 %v312
    %v1111 = vunpack.c.h.b16 %v312
    %v1112 = vunpack.c.l.b16 %v313
    %v1113 = vunpack.c.h.b16 %v313
    %v1114 = vunpack.c.l.b16 %v314
    %v1115 = vunpack.c.h.b16 %v314
    %v1116 = vunpack.c.l.b16 %v315
    %v1117 = vunpack.c.h.b16 %v315
    %v1118 = vunpack.c.l.b16 %v316
    %v1119 = vunpack.c.h.b16 %v316
    %v1120 = vunpack.c.l.b16 %v317
    %v1121 = vunpack.c.h.b16 %v317
    %v1122 = vunpack.c.l.b16 %v318
    %v1123 = vunpack.c.h.b16 %v318
    %v1124 = vunpack.c.l.b16 %v319
    %v1125 = vunpack.c.h.b16 %v319
    %v1126 = vunpack.c.l.b16 %v320
    %v1127 = vunpack.c.h.b16 %v320
    %v1128 = vunpack.c.l.b16 %v321
    %v1129 = vunpack.c.h.b16 %v321
    %v1130 = vunpack.c.l.b16 %v322
    %v1131 = vunpack.c.h.b16 %v322
    %v1132 = vunpack.c.l.b16 %v323
    %v1133 = vunpack.c.h.b16 %v323
    %v1134 = vunpack.c.l.b16 %v324
    %v1135 = vunpack.c.h.b16 %v324
    %v1136 = vunpack.c.l.b16 %v325
    %v1137 = vunpack.c.h.b16 %v325
    %v1138 = vunpack.c.l.b16 %v326
    %v1139 = vunpack.c.h.b16 %v326
    %v1140 = vunpack.c.l.b16 %v327
    %v1141 = vunpack.c.h.b16 %v327
    %v1142 = vunpack.c.l.b16 %v328
    %v1143 = vunpack.c.h.b16 %v328
    %v1144 = vunpack.c.l.b16 %v329
    %v1145 = vunpack.c.h.b16 %v329
    %v1146 = vunpack.c.l.b16 %v330
    %v1147 = vunpack.c.h.b16 %v330
    %v1148 = vunpack.c.l.b16 %v331
    %v1149 = vunpack.c.h.b16 %v331
    %v1150 = vpack.c.b16 %v642, %v638
    %v1151 = vpack.c.b16 %v643, %v639
    %v1152 = vpack.c.b16 %v644, %v640
    %v1153 = vpack.c.b16 %v645, %v641
    %v1154 = vpack.c.b16 %v650, %v646
    %v1155 = vpack.c.b16 %v651, %v647
    %v1156 = vpack.c.b16 %v652, %v648
    %v1157 = vpack.c.b16 %v653, %v649
    %v1158 = vpack.c.b16 %v658, %v654
    %v1159 = vpack.c.b16 %v659, %v655
    %v1160 = vpack.c.b16 %v660, %v656
    %v1161 = vpack.c.b16 %v661, %v657
    %v1162 = vpack.c.b16 %v666, %v662
    %v1163 = vpack.c.b16 %v667, %v663
    %v1164 = vpack.c.b16 %v668, %v664
    %v1165 = vpack.c.b16 %v669, %v665
    %v1166 = vpack.c.b16 %v674, %v670
    %v1167 = vpack.c.b16 %v675, %v671
    %v1168 = vpack.c.b16 %v676, %v672
    %v1169 = vpack.c.b16 %v677, %v673
    %v1170 = vpack.c.b16 %v682, %v678
    %v1171 = vpack.c.b16 %v683, %v679
    %v1172 = vpack.c.b16 %v684, %v680
    %v1173 = vpack.c.b16 %v685, %v681
    %v1174 = vpack.c.b16 %v690, %v686
    %v1175 = vpack.c.b16 %v691, %v687
    %v1176 = vpack.c.b16 %v692, %v688
    %v1177 = vpack.c.b16 %v693, %v689
    %v1178 = vpack.c.b16 %v698, %v694
    %v1179 = vpack.c.b16 %v699, %v695
    %v1180 = vpack.c.b16 %v700, %v696
    %v1181 = vpack.c.b16 %v701, %v697
    %v1182 = vpack.c.b16 %v706, %v702
    %v1183 = vpack.c.b16 %v707, %v703
    %v1184 = vpack.c.b16 %v708, %v704
    %v1185 = vpack.c.b16 %v709, %v705
    %v1186 = vpack.c.b16 %v714, %v710
    %v1187 = vpack.c.b16 %v715, %v711
    %v1188 = vpack.c.b16 %v716, %v712
    %v1189 = vpack.c.b16 %v717, %v713
    %v1190 = vpack.c.b16 %v722, %v718
    %v1191 = vpack.c.b16 %v723, %v719
    %v1192 = vpack.c.b16 %v724, %v720
    %v1193 = vpack.c.b16 %v725, %v721
    %v1194 = vpack.c.b16 %v730, %v726
    %v1195 = vpack.c.b16 %v731, %v727
    %v1196 = vpack.c.b16 %v732, %v728
    %v1197 = vpack.c.b16 %v733, %v729
    %v1198 = vpack.c.b16 %v738, %v734
    %v1199 = vpack.c.b16 %v739, %v735
    %v1200 = vpack.c.b16 %v740, %v736
    %v1201 = vpack.c.b16 %v741, %v737
    %v1202 = vpack.c.b16 %v746, %v742
    %v1203 = vpack.c.b16 %v747, %v743
    %v1204 = vpack.c.b16 %v748, %v744
    %v1205 = vpack.c.b16 %v749, %v745
    %v1206 = vpack.c.b16 %v754, %v750
    %v1207 = vpack.c.b16 %v755, %v751
    %v1208 = vpack.c.b16 %v756, %v752
    %v1209 = vpack.c.b16 %v757, %v753
    %v1210 = vpack.c.b16 %v762, %v758
    %v1211 = vpack.c.b16 %v763, %v759
    %v1212 = vpack.c.b16 %v764, %v760
    %v1213 = vpack.c.b16 %v765, %v761
    %v1214 = vpack.c.b16 %v770, %v766
    %v1215 = vpack.c.b16 %v771, %v767
    %v1216 = vpack.c.b16 %v772, %v768
    %v1217 = vpack.c.b16 %v773, %v769
    %v1218 = vpack.c.b16 %v778, %v774
    %v1219 = vpack.c.b16 %v779, %v775
    %v1220 = vpack.c.b16 %v780, %v776
    %v1221 = vpack.c.b16 %v781, %v777
    %v1222 = vpack.c.b16 %v786, %v782
    %v1223 = vpack.c.b16 %v787, %v783
    %v1224 = vpack.c.b16 %v788, %v784
    %v1225 = vpack.c.b16 %v789, %v785
    %v1226 = vpack.c.b16 %v794, %v790
    %v1227 = vpack.c.b16 %v795, %v791
    %v1228 = vpack.c.b16 %v796, %v792
    %v1229 = vpack.c.b16 %v797, %v793
    %v1230 = vpack.c.b16 %v802, %v798
    %v1231 = vpack.c.b16 %v803, %v799
    %v1232 = vpack.c.b16 %v804, %v800
    %v1233 = vpack.c.b16 %v805, %v801
    %v1234 = vpack.c.b16 %v810, %v806
    %v1235 = vpack.c.b16 %v811, %v807
    %v1236 = vpack.c.b16 %v812, %v808
    %v1237 = vpack.c.b16 %v813, %v809
    %v1238 = vpack.c.b16 %v818, %v814
    %v1239 = vpack.c.b16 %v819, %v815
    %v1240 = vpack.c.b16 %v820, %v816
    %v1241 = vpack.c.b16 %v821, %v817
    %v1242 = vpack.c.b16 %v826, %v822
    %v1243 = vpack.c.b16 %v827, %v823
    %v1244 = vpack.c.b16 %v828, %v824
    %v1245 = vpack.c.b16 %v829, %v825
    %v1246 = vpack.c.b16 %v834, %v830
    %v1247 = vpack.c.b16 %v835, %v831
    %v1248 = vpack.c.b16 %v836, %v832
    %v1249 = vpack.c.b16 %v837, %v833
    %v1250 = vpack.c.b16 %v842, %v838
    %v1251 = vpack.c.b16 %v843, %v839
    %v1252 = vpack.c.b16 %v844, %v840
    %v1253 = vpack.c.b16 %v845, %v841
    %v1254 = vpack.c.b16 %v850, %v846
    %v1255 = vpack.c.b16 %v851, %v847
    %v1256 = vpack.c.b16 %v852, %v848
    %v1257 = vpack.c.b16 %v853, %v849
    %v1258 = vpack.c.b16 %v858, %v854
    %v1259 = vpack.c.b16 %v859, %v855
    %v1260 = vpack.c.b16 %v860, %v856
    %v1261 = vpack.c.b16 %v861, %v857
    %v1262 = vpack.c.b16 %v866, %v862
    %v1263 = vpack.c.b16 %v867, %v863
    %v1264 = vpack.c.b16 %v868, %v864
    %v1265 = vpack.c.b16 %v869, %v865
    %v1266 = vpack.c.b16 %v874, %v870
    %v1267 = vpack.c.b16 %v875, %v871
    %v1268 = vpack.c.b16 %v876, %v872
    %v1269 = vpack.c.b16 %v877, %v873
    %v1270 = vpack.c.b16 %v882, %v878
    %v1271 = vpack.c.b16 %v883, %v879
    %v1272 = vpack.c.b16 %v884, %v880
    %v1273 = vpack.c.b16 %v885, %v881
    %v1274 = vpack.c.b16 %v890, %v886
    %v1275 = vpack.c.b16 %v891, %v887
    %v1276 = vpack.c.b16 %v892, %v888
    %v1277 = vpack.c.b16 %v893, %v889
    %v1278 = vpack.c.b16 %v898, %v894
    %v1279 = vpack.c.b16 %v899, %v895
    %v1280 = vpack.c.b16 %v900, %v896
    %v1281 = vpack.c.b16 %v901, %v897
    %v1282 = vpack.c.b16 %v906, %v902
    %v1283 = vpack.c.b16 %v907, %v903
    %v1284 = vpack.c.b16 %v908, %v904
    %v1285 = vpack.c.b16 %v909, %v905
    %v1286 = vpack.c.b16 %v914, %v910
    %v1287 = vpack.c.b16 %v915, %v911
    %v1288 = vpack.c.b16 %v916, %v912
    %v1289 = vpack.c.b16 %v917, %v913
    %v1290 = vpack.c.b16 %v922, %v918
    %v1291 = vpack.c.b16 %v923, %v919
    %v1292 = vpack.c.b16 %v924, %v920
    %v1293 = vpack.c.b16 %v925, %v921
    %v1294 = vpack.c.b16 %v930, %v926
    %v1295 = vpack.c.b16 %v931, %v927
    %v1296 = vpack.c.b16 %v932, %v928
    %v1297 = vpack.c.b16 %v933, %v929
    %v1298 = vpack.c.b16 %v938, %v934
    %v1299 = vpack.c.b16 %v939, %v935
    %v1300 = vpack.c.b16 %v940, %v936
    %v1301 = vpack.c.b16 %v941, %v937
    %v1302 = vpack.c.b16 %v946, %v942
    %v1303 = vpack.c.b16 %v947, %v943
    %v1304 = vpack.c.b16 %v948, %v944
    %v1305 = vpack.c.b16 %v949, %v945
    %v1306 = vpack.c.b16 %v954, %v950
    %v1307 = vpack.c.b16 %v955, %v951
    %v1308 = vpack.c.b16 %v956, %v952
    %v1309 = vpack.c.b16 %v957, %v953
    %v1310 = vpack.c.b16 %v962, %v958
    %v1311 = vpack.c.b16 %v963, %v959
    %v1312 = vpack.c.b16 %v964, %v960
    %v1313 = vpack.c.b16 %v965, %v961
    %v1314 = vpack.c.b16 %v970, %v966
    %v1315 = vpack.c.b16 %v971, %v967
    %v1316 = vpack.c.b16 %v972, %v968
    %v1317 = vpack.c.b16 %v973, %v969
    %v1318 = vpack.c.b16 %v978, %v974
    %v1319 = vpack.c.b16 %v979, %v975
    %v1320 = vpack.c.b16 %v980, %v976
    %v1321 = vpack.c.b16 %v981, %v977
    %v1322 = vpack.c.b16 %v986, %v982
    %v1323 = vpack.c.b16 %v987, %v983
    %v1324 = vpack.c.b16 %v988, %v984
    %v1325 = vpack.c.b16 %v989, %v985
    %v1326 = vpack.c.b16 %v994, %v990
    %v1327 = vpack.c.b16 %v995, %v991
    %v1328 = vpack.c.b16 %v996, %v992
    %v1329 = vpack.c.b16 %v997, %v993
    %v1330 = vpack.c.b16 %v1002, %v998
    %v1331 = vpack.c.b16 %v1003, %v999
    %v1332 = vpack.c.b16 %v1004, %v1000
    %v1333 = vpack.c.b16 %v1005, %v1001
    %v1334 = vpack.c.b16 %v1010, %v1006
    %v1335 = vpack.c.b16 %v1011, %v1007
    %v1336 = vpack.c.b16 %v1012, %v1008
    %v1337 = vpack.c.b16 %v1013, %v1009
    %v1338 = vpack.c.b16 %v1018, %v1014
    %v1339 = vpack.c.b16 %v1019, %v1015
    %v1340 = vpack.c.b16 %v1020, %v1016
    %v1341 = vpack.c.b16 %v1021, %v1017
    %v1342 = vpack.c.b16 %v1026, %v1022
    %v1343 = vpack.c.b16 %v1027, %v1023
    %v1344 = vpack.c.b16 %v1028, %v1024
    %v1345 = vpack.c.b16 %v1029, %v1025
    %v1346 = vpack.c.b16 %v1034, %v1030
    %v1347 = vpack.c.b16 %v1035, %v1031
    %v1348 = vpack.c.b16 %v1036, %v1032
    %v1349 = vpack.c.b16 %v1037, %v1033
    %v1350 = vpack.c.b16 %v1042, %v1038
    %v1351 = vpack.c.b16 %v1043, %v1039
    %v1352 = vpack.c.b16 %v1044, %v1040
    %v1353 = vpack.c.b16 %v1045, %v1041
    %v1354 = vpack.c.b16 %v1050, %v1046
    %v1355 = vpack.c.b16 %v1051, %v1047
    %v1356 = vpack.c.b16 %v1052, %v1048
    %v1357 = vpack.c.b16 %v1053, %v1049
    %v1358 = vpack.c.b16 %v1058, %v1054
    %v1359 = vpack.c.b16 %v1059, %v1055
    %v1360 = vpack.c.b16 %v1060, %v1056
    %v1361 = vpack.c.b16 %v1061, %v1057
    %v1362 = vpack.c.b16 %v1066, %v1062
    %v1363 = vpack.c.b16 %v1067, %v1063
    %v1364 = vpack.c.b16 %v1068, %v1064
    %v1365 = vpack.c.b16 %v1069, %v1065
    %v1366 = vpack.c.b16 %v1074, %v1070
    %v1367 = vpack.c.b16 %v1075, %v1071
    %v1368 = vpack.c.b16 %v1076, %v1072
    %v1369 = vpack.c.b16 %v1077, %v1073
    %v1370 = vpack.c.b16 %v1082, %v1078
    %v1371 = vpack.c.b16 %v1083, %v1079
    %v1372 = vpack.c.b16 %v1084, %v1080
    %v1373 = vpack.c.b16 %v1085, %v1081
    %v1374 = vpack.c.b16 %v1090, %v1086
    %v1375 = vpack.c.b16 %v1091, %v1087
    %v1376 = vpack.c.b16 %v1092, %v1088
    %v1377 = vpack.c.b16 %v1093, %v1089
    %v1378 = vpack.c.b16 %v1098, %v1094
    %v1379 = vpack.c.b16 %v1099, %v1095
    %v1380 = vpack.c.b16 %v1100, %v1096
    %v1381 = vpack.c.b16 %v1101, %v1097
    %v1382 = vpack.c.b16 %v1106, %v1102
    %v1383 = vpack.c.b16 %v1107, %v1103
    %v1384 = vpack.c.b16 %v1108, %v1104
    %v1385 = vpack.c.b16 %v1109, %v1105
    %v1386 = vpack.c.b16 %v1114, %v1110
    %v1387 = vpack.c.b16 %v1115, %v1111
    %v1388 = vpack.c.b16 %v1116, %v1112
    %v1389 = vpack.c.b16 %v1117, %v1113
    %v1390 = vpack.c.b16 %v1122, %v1118
    %v1391 = vpack.c.b16 %v1123, %v1119
    %v1392 = vpack.c.b16 %v1124, %v1120
    %v1393 = vpack.c.b16 %v1125, %v1121
    %v1394 = vpack.c.b16 %v1130, %v1126
    %v1395 = vpack.c.b16 %v1131, %v1127
    %v1396 = vpack.c.b16 %v1132, %v1128
    %v1397 = vpack.c.b16 %v1133, %v1129
    %v1398 = vpack.c.b16 %v1138, %v1134
    %v1399 = vpack.c.b16 %v1139, %v1135
    %v1400 = vpack.c.b16 %v1140, %v1136
    %v1401 = vpack.c.b16 %v1141, %v1137
    %v1402 = vpack.c.b16 %v1146, %v1142
    %v1403 = vpack.c.b16 %v1147, %v1143
    %v1404 = vpack.c.b16 %v1148, %v1144
    %v1405 = vpack.c.b16 %v1149, %v1145
    %1662 = vmatprep.subr.bf16.mxu0 %v1151
    %1663 = vmatpush1.bf16.msra.mxu0 %v1150
    %1664 = vmatprep.subr.bf16.mxu0 %v1155
    %1665 = vmatpush1.bf16.msra.mxu0 %v1154
    %1666 = vmatprep.subr.bf16.mxu0 %v1159
    %1667 = vmatpush1.bf16.msra.mxu0 %v1158
    %1668 = vmatprep.subr.bf16.mxu0 %v1163
    %1669 = vmatpush1.bf16.msra.mxu0 %v1162
    %1670 = vmatprep.subr.bf16.mxu0 %v1167
    %1671 = vmatpush1.bf16.msra.mxu0 %v1166
    %1672 = vmatprep.subr.bf16.mxu0 %v1171
    %1673 = vmatpush1.bf16.msra.mxu0 %v1170
    %1674 = vmatprep.subr.bf16.mxu0 %v1175
    %1675 = vmatpush1.bf16.msra.mxu0 %v1174
    %1676 = vmatprep.subr.bf16.mxu0 %v1179
    %1677 = vmatpush1.bf16.msra.mxu0 %v1178
    %1678 = vmatprep.subr.bf16.mxu0 %v1183
    %1679 = vmatpush1.bf16.msra.mxu0 %v1182
    %1680 = vmatprep.subr.bf16.mxu0 %v1187
    %1681 = vmatpush1.bf16.msra.mxu0 %v1186
    %1682 = vmatprep.subr.bf16.mxu0 %v1191
    %1683 = vmatpush1.bf16.msra.mxu0 %v1190
    %1684 = vmatprep.subr.bf16.mxu0 %v1195
    %1685 = vmatpush1.bf16.msra.mxu0 %v1194
    %1686 = vmatprep.subr.bf16.mxu0 %v1199
    %1687 = vmatpush1.bf16.msra.mxu0 %v1198
    %1688 = vmatprep.subr.bf16.mxu0 %v1203
    %1689 = vmatpush1.bf16.msra.mxu0 %v1202
    %1690 = vmatprep.subr.bf16.mxu0 %v1207
    %1691 = vmatpush1.bf16.msra.mxu0 %v1206
    %1692 = vmatprep.subr.bf16.mxu0 %v1211
    %1693 = vmatpush1.bf16.msra.mxu0 %v1210
    %1694 = vmatprep.mubr.bf16.mxu0 %v367
    %1695 = vmatmul.mubr.bf16.gmra.mrb[0].mxu0 %v366
    %v1696 = vpop.f32.mrb[0].mxu0
    %v1697 = vadd.f32 %v337, %v1696
    %v1698 = vpop.f32.mrb[0].mxu0
    %v1699 = vadd.f32 %v341, %v1698
    %v1700 = vpop.f32.mrb[0].mxu0
    %v1701 = vpop.f32.mrb[0].mxu0
    %1702 = vdwg.mxu0
    %1703 = vmatprep.subr.bf16.mxu0 %v1215
    %1704 = vmatpush1.bf16.msra.mxu0 %v1214
    %1705 = vmatprep.subr.bf16.mxu0 %v1219
    %1706 = vmatpush1.bf16.msra.mxu0 %v1218
    %1707 = vmatprep.subr.bf16.mxu0 %v1223
    %1708 = vmatpush1.bf16.msra.mxu0 %v1222
    %1709 = vmatprep.subr.bf16.mxu0 %v1227
    %1710 = vmatpush1.bf16.msra.mxu0 %v1226
    %1711 = vmatprep.subr.bf16.mxu0 %v1231
    %1712 = vmatpush1.bf16.msra.mxu0 %v1230
    %1713 = vmatprep.subr.bf16.mxu0 %v1235
    %1714 = vmatpush1.bf16.msra.mxu0 %v1234
    %1715 = vmatprep.subr.bf16.mxu0 %v1239
    %1716 = vmatpush1.bf16.msra.mxu0 %v1238
    %1717 = vmatprep.subr.bf16.mxu0 %v1243
    %1718 = vmatpush1.bf16.msra.mxu0 %v1242
    %1719 = vmatprep.subr.bf16.mxu0 %v1247
    %1720 = vmatpush1.bf16.msra.mxu0 %v1246
    %1721 = vmatprep.subr.bf16.mxu0 %v1251
    %1722 = vmatpush1.bf16.msra.mxu0 %v1250
    %1723 = vmatprep.subr.bf16.mxu0 %v1255
    %1724 = vmatpush1.bf16.msra.mxu0 %v1254
    %1725 = vmatprep.subr.bf16.mxu0 %v1259
    %1726 = vmatpush1.bf16.msra.mxu0 %v1258
    %1727 = vmatprep.subr.bf16.mxu0 %v1263
    %1728 = vmatpush1.bf16.msra.mxu0 %v1262
    %1729 = vmatprep.subr.bf16.mxu0 %v1267
    %1730 = vmatpush1.bf16.msra.mxu0 %v1266
    %1731 = vmatprep.subr.bf16.mxu0 %v1271
    %1732 = vmatpush1.bf16.msra.mxu0 %v1270
    %1733 = vmatprep.subr.bf16.mxu0 %v1275
    %1734 = vmatpush1.bf16.msra.mxu0 %v1274
    %1735 = vmatprep.mubr.bf16.mxu0 %v369
    %1736 = vmatmul.mubr.bf16.gmra.mrb[0].mxu0 %v368
    %v1737 = vpop.f32.mrb[0].mxu0
    %v1738 = vadd.f32 %v1697, %v1737
    %v1739 = vpop.f32.mrb[0].mxu0
    %v1740 = vadd.f32 %v1699, %v1739
    %v1741 = vpop.f32.mrb[0].mxu0
    %v1742 = vpop.f32.mrb[0].mxu0
    %1743 = vdwg.mxu0
    %1744 = vmatprep.subr.bf16.mxu0 %v1279
    %1745 = vmatpush1.bf16.msra.mxu0 %v1278
    %1746 = vmatprep.subr.bf16.mxu0 %v1283
    %1747 = vmatpush1.bf16.msra.mxu0 %v1282
    %1748 = vmatprep.subr.bf16.mxu0 %v1287
    %1749 = vmatpush1.bf16.msra.mxu0 %v1286
    %1750 = vmatprep.subr.bf16.mxu0 %v1291
    %1751 = vmatpush1.bf16.msra.mxu0 %v1290
    %1752 = vmatprep.subr.bf16.mxu0 %v1295
    %1753 = vmatpush1.bf16.msra.mxu0 %v1294
    %1754 = vmatprep.subr.bf16.mxu0 %v1299
    %1755 = vmatpush1.bf16.msra.mxu0 %v1298
    %1756 = vmatprep.subr.bf16.mxu0 %v1303
    %1757 = vmatpush1.bf16.msra.mxu0 %v1302
    %1758 = vmatprep.subr.bf16.mxu0 %v1307
    %1759 = vmatpush1.bf16.msra.mxu0 %v1306
    %1760 = vmatprep.subr.bf16.mxu0 %v1311
    %1761 = vmatpush1.bf16.msra.mxu0 %v1310
    %1762 = vmatprep.subr.bf16.mxu0 %v1315
    %1763 = vmatpush1.bf16.msra.mxu0 %v1314
    %1764 = vmatprep.subr.bf16.mxu0 %v1319
    %1765 = vmatpush1.bf16.msra.mxu0 %v1318
    %1766 = vmatprep.subr.bf16.mxu0 %v1323
    %1767 = vmatpush1.bf16.msra.mxu0 %v1322
    %1768 = vmatprep.subr.bf16.mxu0 %v1327
    %1769 = vmatpush1.bf16.msra.mxu0 %v1326
    %1770 = vmatprep.subr.bf16.mxu0 %v1331
    %1771 = vmatpush1.bf16.msra.mxu0 %v1330
    %1772 = vmatprep.subr.bf16.mxu0 %v1335
    %1773 = vmatpush1.bf16.msra.mxu0 %v1334
    %1774 = vmatprep.subr.bf16.mxu0 %v1339
    %1775 = vmatpush1.bf16.msra.mxu0 %v1338
    %1776 = vmatprep.mubr.bf16.mxu0 %v371
    %1777 = vmatmul.mubr.bf16.gmra.mrb[0].mxu0 %v370
    %v1778 = vpop.f32.mrb[0].mxu0
    %v1779 = vadd.f32 %v1738, %v1778
    %v1780 = vpop.f32.mrb[0].mxu0
    %v1781 = vadd.f32 %v1740, %v1780
    %v1782 = vpop.f32.mrb[0].mxu0
    %v1783 = vpop.f32.mrb[0].mxu0
    %1784 = vdwg.mxu0
    %1785 = vmatprep.subr.bf16.mxu0 %v1343
    %1786 = vmatpush1.bf16.msra.mxu0 %v1342
    %1787 = vmatprep.subr.bf16.mxu0 %v1347
    %1788 = vmatpush1.bf16.msra.mxu0 %v1346
    %1789 = vmatprep.subr.bf16.mxu0 %v1351
    %1790 = vmatpush1.bf16.msra.mxu0 %v1350
    %1791 = vmatprep.subr.bf16.mxu0 %v1355
    %1792 = vmatpush1.bf16.msra.mxu0 %v1354
    %1793 = vmatprep.subr.bf16.mxu0 %v1359
    %1794 = vmatpush1.bf16.msra.mxu0 %v1358
    %1795 = vmatprep.subr.bf16.mxu0 %v1363
    %1796 = vmatpush1.bf16.msra.mxu0 %v1362
    %1797 = vmatprep.subr.bf16.mxu0 %v1367
    %1798 = vmatpush1.bf16.msra.mxu0 %v1366
    %1799 = vmatprep.subr.bf16.mxu0 %v1371
    %1800 = vmatpush1.bf16.msra.mxu0 %v1370
    %1801 = vmatprep.subr.bf16.mxu0 %v1375
    %1802 = vmatpush1.bf16.msra.mxu0 %v1374
    %1803 = vmatprep.subr.bf16.mxu0 %v1379
    %1804 = vmatpush1.bf16.msra.mxu0 %v1378
    %1805 = vmatprep.subr.bf16.mxu0 %v1383
    %1806 = vmatpush1.bf16.msra.mxu0 %v1382
    %1807 = vmatprep.subr.bf16.mxu0 %v1387
    %1808 = vmatpush1.bf16.msra.mxu0 %v1386
    %1809 = vmatprep.subr.bf16.mxu0 %v1391
    %1810 = vmatpush1.bf16.msra.mxu0 %v1390
    %1811 = vmatprep.subr.bf16.mxu0 %v1395
    %1812 = vmatpush1.bf16.msra.mxu0 %v1394
    %1813 = vmatprep.subr.bf16.mxu0 %v1399
    %1814 = vmatpush1.bf16.msra.mxu0 %v1398
    %1815 = vmatprep.subr.bf16.mxu0 %v1403
    %1816 = vmatpush1.bf16.msra.mxu0 %v1402
    %1817 = vmatprep.mubr.bf16.mxu0 %v373
    %1818 = vmatmul.mubr.bf16.gmra.mrb[0].mxu0 %v372
    %v1819 = vpop.f32.mrb[0].mxu0
    %v1820 = vadd.f32 %v1779, %v1819
    %v1821 = vpop.f32.mrb[0].mxu0
    %v1822 = vadd.f32 %v1781, %v1821
    %v1823 = vpop.f32.mrb[0].mxu0
    %v1824 = vpop.f32.mrb[0].mxu0
    %1825 = vdwg.mxu0
    %1826 = vmatprep.subr.bf16.mxu0 %v1153
    %1827 = vmatpush1.bf16.msra.mxu0 %v1152
    %1828 = vmatprep.subr.bf16.mxu0 %v1157
    %1829 = vmatpush1.bf16.msra.mxu0 %v1156
    %1830 = vmatprep.subr.bf16.mxu0 %v1161
    %1831 = vmatpush1.bf16.msra.mxu0 %v1160
    %1832 = vmatprep.subr.bf16.mxu0 %v1165
    %1833 = vmatpush1.bf16.msra.mxu0 %v1164
    %1834 = vmatprep.subr.bf16.mxu0 %v1169
    %1835 = vmatpush1.bf16.msra.mxu0 %v1168
    %1836 = vmatprep.subr.bf16.mxu0 %v1173
    %1837 = vmatpush1.bf16.msra.mxu0 %v1172
    %1838 = vmatprep.subr.bf16.mxu0 %v1177
    %1839 = vmatpush1.bf16.msra.mxu0 %v1176
    %1840 = vmatprep.subr.bf16.mxu0 %v1181
    %1841 = vmatpush1.bf16.msra.mxu0 %v1180
    %1842 = vmatprep.subr.bf16.mxu0 %v1185
    %1843 = vmatpush1.bf16.msra.mxu0 %v1184
    %1844 = vmatprep.subr.bf16.mxu0 %v1189
    %1845 = vmatpush1.bf16.msra.mxu0 %v1188
    %1846 = vmatprep.subr.bf16.mxu0 %v1193
    %1847 = vmatpush1.bf16.msra.mxu0 %v1192
    %1848 = vmatprep.subr.bf16.mxu0 %v1197
    %1849 = vmatpush1.bf16.msra.mxu0 %v1196
    %1850 = vmatprep.subr.bf16.mxu0 %v1201
    %1851 = vmatpush1.bf16.msra.mxu0 %v1200
    %1852 = vmatprep.subr.bf16.mxu0 %v1205
    %1853 = vmatpush1.bf16.msra.mxu0 %v1204
    %1854 = vmatprep.subr.bf16.mxu0 %v1209
    %1855 = vmatpush1.bf16.msra.mxu0 %v1208
    %1856 = vmatprep.subr.bf16.mxu0 %v1213
    %1857 = vmatpush1.bf16.msra.mxu0 %v1212
    %1858 = vmatprep.mubr.bf16.mxu0 %v367
    %1859 = vmatmul.mubr.bf16.gmra.mrb[0].mxu0 %v366
    %v1860 = vpop.f32.mrb[0].mxu0
    %v1861 = vadd.f32 %v345, %v1860
    %v1862 = vpop.f32.mrb[0].mxu0
    %v1863 = vadd.f32 %v349, %v1862
    %v1864 = vpop.f32.mrb[0].mxu0
    %v1865 = vpop.f32.mrb[0].mxu0
    %1866 = vdwg.mxu0
    %1867 = vmatprep.subr.bf16.mxu0 %v1217
    %1868 = vmatpush1.bf16.msra.mxu0 %v1216
    %1869 = vmatprep.subr.bf16.mxu0 %v1221
    %1870 = vmatpush1.bf16.msra.mxu0 %v1220
    %1871 = vmatprep.subr.bf16.mxu0 %v1225
    %1872 = vmatpush1.bf16.msra.mxu0 %v1224
    %1873 = vmatprep.subr.bf16.mxu0 %v1229
    %1874 = vmatpush1.bf16.msra.mxu0 %v1228
    %1875 = vmatprep.subr.bf16.mxu0 %v1233
    %1876 = vmatpush1.bf16.msra.mxu0 %v1232
    %1877 = vmatprep.subr.bf16.mxu0 %v1237
    %1878 = vmatpush1.bf16.msra.mxu0 %v1236
    %1879 = vmatprep.subr.bf16.mxu0 %v1241
    %1880 = vmatpush1.bf16.msra.mxu0 %v1240
    %1881 = vmatprep.subr.bf16.mxu0 %v1245
    %1882 = vmatpush1.bf16.msra.mxu0 %v1244
    %1883 = vmatprep.subr.bf16.mxu0 %v1249
    %1884 = vmatpush1.bf16.msra.mxu0 %v1248
    %1885 = vmatprep.subr.bf16.mxu0 %v1253
    %1886 = vmatpush1.bf16.msra.mxu0 %v1252
    %1887 = vmatprep.subr.bf16.mxu0 %v1257
    %1888 = vmatpush1.bf16.msra.mxu0 %v1256
    %1889 = vmatprep.subr.bf16.mxu0 %v1261
    %1890 = vmatpush1.bf16.msra.mxu0 %v1260
    %1891 = vmatprep.subr.bf16.mxu0 %v1265
    %1892 = vmatpush1.bf16.msra.mxu0 %v1264
    %1893 = vmatprep.subr.bf16.mxu0 %v1269
    %1894 = vmatpush1.bf16.msra.mxu0 %v1268
    %1895 = vmatprep.subr.bf16.mxu0 %v1273
    %1896 = vmatpush1.bf16.msra.mxu0 %v1272
    %1897 = vmatprep.subr.bf16.mxu0 %v1277
    %1898 = vmatpush1.bf16.msra.mxu0 %v1276
    %1899 = vmatprep.mubr.bf16.mxu0 %v369
    %1900 = vmatmul.mubr.bf16.gmra.mrb[0].mxu0 %v368
    %v1901 = vpop.f32.mrb[0].mxu0
    %v1902 = vadd.f32 %v1861, %v1901
    %v1903 = vpop.f32.mrb[0].mxu0
    %v1904 = vadd.f32 %v1863, %v1903
    %v1905 = vpop.f32.mrb[0].mxu0
    %v1906 = vpop.f32.mrb[0].mxu0
    %1907 = vdwg.mxu0
    %1908 = vmatprep.subr.bf16.mxu0 %v1281
    %1909 = vmatpush1.bf16.msra.mxu0 %v1280
    %1910 = vmatprep.subr.bf16.mxu0 %v1285
    %1911 = vmatpush1.bf16.msra.mxu0 %v1284
    %1912 = vmatprep.subr.bf16.mxu0 %v1289
    %1913 = vmatpush1.bf16.msra.mxu0 %v1288
    %1914 = vmatprep.subr.bf16.mxu0 %v1293
    %1915 = vmatpush1.bf16.msra.mxu0 %v1292
    %1916 = vmatprep.subr.bf16.mxu0 %v1297
    %1917 = vmatpush1.bf16.msra.mxu0 %v1296
    %1918 = vmatprep.subr.bf16.mxu0 %v1301
    %1919 = vmatpush1.bf16.msra.mxu0 %v1300
    %1920 = vmatprep.subr.bf16.mxu0 %v1305
    %1921 = vmatpush1.bf16.msra.mxu0 %v1304
    %1922 = vmatprep.subr.bf16.mxu0 %v1309
    %1923 = vmatpush1.bf16.msra.mxu0 %v1308
    %1924 = vmatprep.subr.bf16.mxu0 %v1313
    %1925 = vmatpush1.bf16.msra.mxu0 %v1312
    %1926 = vmatprep.subr.bf16.mxu0 %v1317
    %1927 = vmatpush1.bf16.msra.mxu0 %v1316
    %1928 = vmatprep.subr.bf16.mxu0 %v1321
    %1929 = vmatpush1.bf16.msra.mxu0 %v1320
    %1930 = vmatprep.subr.bf16.mxu0 %v1325
    %1931 = vmatpush1.bf16.msra.mxu0 %v1324
    %1932 = vmatprep.subr.bf16.mxu0 %v1329
    %1933 = vmatpush1.bf16.msra.mxu0 %v1328
    %1934 = vmatprep.subr.bf16.mxu0 %v1333
    %1935 = vmatpush1.bf16.msra.mxu0 %v1332
    %1936 = vmatprep.subr.bf16.mxu0 %v1337
    %1937 = vmatpush1.bf16.msra.mxu0 %v1336
    %1938 = vmatprep.subr.bf16.mxu0 %v1341
    %1939 = vmatpush1.bf16.msra.mxu0 %v1340
    %1940 = vmatprep.mubr.bf16.mxu0 %v371
    %1941 = vmatmul.mubr.bf16.gmra.mrb[0].mxu0 %v370
    %v1942 = vpop.f32.mrb[0].mxu0
    %v1943 = vadd.f32 %v1902, %v1942
    %v1944 = vpop.f32.mrb[0].mxu0
    %v1945 = vadd.f32 %v1904, %v1944
    %v1946 = vpop.f32.mrb[0].mxu0
    %v1947 = vpop.f32.mrb[0].mxu0
    %1948 = vdwg.mxu0
    %1949 = vmatprep.subr.bf16.mxu0 %v1345
    %1950 = vmatpush1.bf16.msra.mxu0 %v1344
    %1951 = vmatprep.subr.bf16.mxu0 %v1349
    %1952 = vmatpush1.bf16.msra.mxu0 %v1348
    %1953 = vmatprep.subr.bf16.mxu0 %v1353
    %1954 = vmatpush1.bf16.msra.mxu0 %v1352
    %1955 = vmatprep.subr.bf16.mxu0 %v1357
    %1956 = vmatpush1.bf16.msra.mxu0 %v1356
    %1957 = vmatprep.subr.bf16.mxu0 %v1361
    %1958 = vmatpush1.bf16.msra.mxu0 %v1360
    %1959 = vmatprep.subr.bf16.mxu0 %v1365
    %1960 = vmatpush1.bf16.msra.mxu0 %v1364
    %1961 = vmatprep.subr.bf16.mxu0 %v1369
    %1962 = vmatpush1.bf16.msra.mxu0 %v1368
    %1963 = vmatprep.subr.bf16.mxu0 %v1373
    %1964 = vmatpush1.bf16.msra.mxu0 %v1372
    %1965 = vmatprep.subr.bf16.mxu0 %v1377
    %1966 = vmatpush1.bf16.msra.mxu0 %v1376
    %1967 = vmatprep.subr.bf16.mxu0 %v1381
    %1968 = vmatpush1.bf16.msra.mxu0 %v1380
    %1969 = vmatprep.subr.bf16.mxu0 %v1385
    %1970 = vmatpush1.bf16.msra.mxu0 %v1384
    %1971 = vmatprep.subr.bf16.mxu0 %v1389
    %1972 = vmatpush1.bf16.msra.mxu0 %v1388
    %1973 = vmatprep.subr.bf16.mxu0 %v1393
    %1974 = vmatpush1.bf16.msra.mxu0 %v1392
    %1975 = vmatprep.subr.bf16.mxu0 %v1397
    %1976 = vmatpush1.bf16.msra.mxu0 %v1396
    %1977 = vmatprep.subr.bf16.mxu0 %v1401
    %1978 = vmatpush1.bf16.msra.mxu0 %v1400
    %1979 = vmatprep.subr.bf16.mxu0 %v1405
    %1980 = vmatpush1.bf16.msra.mxu0 %v1404
    %1981 = vmatprep.mubr.bf16.mxu0 %v373
    %1982 = vmatmul.mubr.bf16.gmra.mrb[0].mxu0 %v372
    %v1983 = vpop.f32.mrb[0].mxu0
    %v1984 = vadd.f32 %v1943, %v1983
    %v1985 = vpop.f32.mrb[0].mxu0
    %v1986 = vadd.f32 %v1945, %v1985
    %v1987 = vpop.f32.mrb[0].mxu0
    %v1988 = vpop.f32.mrb[0].mxu0
    %1989 = vdwg.mxu0
    %v1990 = vmax.f32 %v1820, 0.0
    %v1991 = vmax.f32 %v1822, 0.0
    %v1992 = vmax.f32 %v1984, 0.0
    %v1993 = vmax.f32 %v1986, 0.0
    %v1994 = vld [vmem:[%s3] sm:$0xff]
    %v1995 = vld [vmem:[%s3 + $0x8] sm:$0xff]
    %v1996 = vld [vmem:[%s3 + $0x10] sm:$0xff]
    %v1997 = vld [vmem:[%s3 + $0x18] sm:$0xff]
    %v1998 = vld [vmem:[%s3 + $0x20] sm:$0xff]
    %v1999 = vld [vmem:[%s3 + $0x28] sm:$0xff]
    %v2000 = vld [vmem:[%s3 + $0x30] sm:$0xff]
    %v2001 = vld [vmem:[%s3 + $0x38] sm:$0xff]
    %v2002 = vld [vmem:[%s3 + $0x40] sm:$0xff]
    %v2003 = vld [vmem:[%s3 + $0x48] sm:$0xff]
    %v2004 = vld [vmem:[%s3 + $0x50] sm:$0xff]
    %v2005 = vld [vmem:[%s3 + $0x58] sm:$0xff]
    %v2006 = vld [vmem:[%s3 + $0x60] sm:$0xff]
    %v2007 = vld [vmem:[%s3 + $0x68] sm:$0xff]
    %v2008 = vld [vmem:[%s3 + $0x70] sm:$0xff]
    %v2009 = vld [vmem:[%s3 + $0x78] sm:$0xff]
    %v2010 = vld [vmem:[%s3 + $0x80] sm:$0xff]
    %v2011 = vld [vmem:[%s3 + $0x88] sm:$0xff]
    %v2012 = vld [vmem:[%s3 + $0x90] sm:$0xff]
    %v2013 = vld [vmem:[%s3 + $0x98] sm:$0xff]
    %v2014 = vld [vmem:[%s3 + $0xa0] sm:$0xff]
    %v2015 = vld [vmem:[%s3 + $0xa8] sm:$0xff]
    %v2016 = vld [vmem:[%s3 + $0xb0] sm:$0xff]
    %v2017 = vld [vmem:[%s3 + $0xb8] sm:$0xff]
    %v2018 = vld [vmem:[%s3 + $0xc0] sm:$0xff]
    %v2019 = vld [vmem:[%s3 + $0xc8] sm:$0xff]
    %v2020 = vld [vmem:[%s3 + $0xd0] sm:$0xff]
    %v2021 = vld [vmem:[%s3 + $0xd8] sm:$0xff]
    %v2022 = vld [vmem:[%s3 + $0xe0] sm:$0xff]
    %v2023 = vld [vmem:[%s3 + $0xe8] sm:$0xff]
    %v2024 = vld [vmem:[%s3 + $0xf0] sm:$0xff]
    %v2025 = vld [vmem:[%s3 + $0xf8] sm:$0xff]
    %v2026 = vld [vmem:[%s3 + $0x100] sm:$0xff]
    %v2027 = vld [vmem:[%s3 + $0x108] sm:$0xff]
    %v2028 = vld [vmem:[%s3 + $0x110] sm:$0xff]
    %v2029 = vld [vmem:[%s3 + $0x118] sm:$0xff]
    %v2030 = vld [vmem:[%s3 + $0x120] sm:$0xff]
    %v2031 = vld [vmem:[%s3 + $0x128] sm:$0xff]
    %v2032 = vld [vmem:[%s3 + $0x130] sm:$0xff]
    %v2033 = vld [vmem:[%s3 + $0x138] sm:$0xff]
    %v2034 = vld [vmem:[%s3 + $0x140] sm:$0xff]
    %v2035 = vld [vmem:[%s3 + $0x148] sm:$0xff]
    %v2036 = vld [vmem:[%s3 + $0x150] sm:$0xff]
    %v2037 = vld [vmem:[%s3 + $0x158] sm:$0xff]
    %v2038 = vld [vmem:[%s3 + $0x160] sm:$0xff]
    %v2039 = vld [vmem:[%s3 + $0x168] sm:$0xff]
    %v2040 = vld [vmem:[%s3 + $0x170] sm:$0xff]
    %v2041 = vld [vmem:[%s3 + $0x178] sm:$0xff]
    %v2042 = vld [vmem:[%s3 + $0x180] sm:$0xff]
    %v2043 = vld [vmem:[%s3 + $0x188] sm:$0xff]
    %v2044 = vld [vmem:[%s3 + $0x190] sm:$0xff]
    %v2045 = vld [vmem:[%s3 + $0x198] sm:$0xff]
    %v2046 = vld [vmem:[%s3 + $0x1a0] sm:$0xff]
    %v2047 = vld [vmem:[%s3 + $0x1a8] sm:$0xff]
    %v2048 = vld [vmem:[%s3 + $0x1b0] sm:$0xff]
    %v2049 = vld [vmem:[%s3 + $0x1b8] sm:$0xff]
    %v2050 = vld [vmem:[%s3 + $0x1c0] sm:$0xff]
    %v2051 = vld [vmem:[%s3 + $0x1c8] sm:$0xff]
    %v2052 = vld [vmem:[%s3 + $0x1d0] sm:$0xff]
    %v2053 = vld [vmem:[%s3 + $0x1d8] sm:$0xff]
    %v2054 = vld [vmem:[%s3 + $0x1e0] sm:$0xff]
    %v2055 = vld [vmem:[%s3 + $0x1e8] sm:$0xff]
    %v2056 = vld [vmem:[%s3 + $0x1f0] sm:$0xff]
    %v2057 = vld [vmem:[%s3 + $0x1f8] sm:$0xff]
    %v2058 = vld [vmem:[%s4] sm:$0x3]
    %v2059 = vpack.c.bf16 %v1990, %v1990
    %v2060 = vpack.c.bf16 %v1991, %v1991
    %v2061 = vpack.c.bf16 %v1992, %v1992
    %v2062 = vpack.c.bf16 %v1993, %v1993
    %v2064 = vlaneseq
    %v2065 = vshrl.u32 %v2064, 7
    %v2066 = vsub.s32 0, %v2065
    %v2067 = vrot.slane %v2058, %v2066
    %v2068 = vlaneseq
    %v2069 = vshrl.u32 %v2068, 7
    %v2070 = vsub.s32 1, %v2069
    %v2071 = vrot.slane %v2058, %v2070
    %v2138 = vunpack.c.l.b16 %v1994
    %v2139 = vunpack.c.h.b16 %v1994
    %v2140 = vunpack.c.l.b16 %v1995
    %v2141 = vunpack.c.h.b16 %v1995
    %v2142 = vunpack.c.l.b16 %v1996
    %v2143 = vunpack.c.h.b16 %v1996
    %v2144 = vunpack.c.l.b16 %v1997
    %v2145 = vunpack.c.h.b16 %v1997
    %v2146 = vunpack.c.l.b16 %v1998
    %v2147 = vunpack.c.h.b16 %v1998
    %v2148 = vunpack.c.l.b16 %v1999
    %v2149 = vunpack.c.h.b16 %v1999
    %v2150 = vunpack.c.l.b16 %v2000
    %v2151 = vunpack.c.h.b16 %v2000
    %v2152 = vunpack.c.l.b16 %v2001
    %v2153 = vunpack.c.h.b16 %v2001
    %v2154 = vunpack.c.l.b16 %v2002
    %v2155 = vunpack.c.h.b16 %v2002
    %v2156 = vunpack.c.l.b16 %v2003
    %v2157 = vunpack.c.h.b16 %v2003
    %v2158 = vunpack.c.l.b16 %v2004
    %v2159 = vunpack.c.h.b16 %v2004
    %v2160 = vunpack.c.l.b16 %v2005
    %v2161 = vunpack.c.h.b16 %v2005
    %v2162 = vunpack.c.l.b16 %v2006
    %v2163 = vunpack.c.h.b16 %v2006
    %v2164 = vunpack.c.l.b16 %v2007
    %v2165 = vunpack.c.h.b16 %v2007
    %v2166 = vunpack.c.l.b16 %v2008
    %v2167 = vunpack.c.h.b16 %v2008
    %v2168 = vunpack.c.l.b16 %v2009
    %v2169 = vunpack.c.h.b16 %v2009
    %v2170 = vunpack.c.l.b16 %v2010
    %v2171 = vunpack.c.h.b16 %v2010
    %v2172 = vunpack.c.l.b16 %v2011
    %v2173 = vunpack.c.h.b16 %v2011
    %v2174 = vunpack.c.l.b16 %v2012
    %v2175 = vunpack.c.h.b16 %v2012
    %v2176 = vunpack.c.l.b16 %v2013
    %v2177 = vunpack.c.h.b16 %v2013
    %v2178 = vunpack.c.l.b16 %v2014
    %v2179 = vunpack.c.h.b16 %v2014
    %v2180 = vunpack.c.l.b16 %v2015
    %v2181 = vunpack.c.h.b16 %v2015
    %v2182 = vunpack.c.l.b16 %v2016
    %v2183 = vunpack.c.h.b16 %v2016
    %v2184 = vunpack.c.l.b16 %v2017
    %v2185 = vunpack.c.h.b16 %v2017
    %v2186 = vunpack.c.l.b16 %v2018
    %v2187 = vunpack.c.h.b16 %v2018
    %v2188 = vunpack.c.l.b16 %v2019
    %v2189 = vunpack.c.h.b16 %v2019
    %v2190 = vunpack.c.l.b16 %v2020
    %v2191 = vunpack.c.h.b16 %v2020
    %v2192 = vunpack.c.l.b16 %v2021
    %v2193 = vunpack.c.h.b16 %v2021
    %v2194 = vunpack.c.l.b16 %v2022
    %v2195 = vunpack.c.h.b16 %v2022
    %v2196 = vunpack.c.l.b16 %v2023
    %v2197 = vunpack.c.h.b16 %v2023
    %v2198 = vunpack.c.l.b16 %v2024
    %v2199 = vunpack.c.h.b16 %v2024
    %v2200 = vunpack.c.l.b16 %v2025
    %v2201 = vunpack.c.h.b16 %v2025
    %v2202 = vunpack.c.l.b16 %v2026
    %v2203 = vunpack.c.h.b16 %v2026
    %v2204 = vunpack.c.l.b16 %v2027
    %v2205 = vunpack.c.h.b16 %v2027
    %v2206 = vunpack.c.l.b16 %v2028
    %v2207 = vunpack.c.h.b16 %v2028
    %v2208 = vunpack.c.l.b16 %v2029
    %v2209 = vunpack.c.h.b16 %v2029
    %v2210 = vunpack.c.l.b16 %v2030
    %v2211 = vunpack.c.h.b16 %v2030
    %v2212 = vunpack.c.l.b16 %v2031
    %v2213 = vunpack.c.h.b16 %v2031
    %v2214 = vunpack.c.l.b16 %v2032
    %v2215 = vunpack.c.h.b16 %v2032
    %v2216 = vunpack.c.l.b16 %v2033
    %v2217 = vunpack.c.h.b16 %v2033
    %v2218 = vunpack.c.l.b16 %v2034
    %v2219 = vunpack.c.h.b16 %v2034
    %v2220 = vunpack.c.l.b16 %v2035
    %v2221 = vunpack.c.h.b16 %v2035
    %v2222 = vunpack.c.l.b16 %v2036
    %v2223 = vunpack.c.h.b16 %v2036
    %v2224 = vunpack.c.l.b16 %v2037
    %v2225 = vunpack.c.h.b16 %v2037
    %v2226 = vunpack.c.l.b16 %v2038
    %v2227 = vunpack.c.h.b16 %v2038
    %v2228 = vunpack.c.l.b16 %v2039
    %v2229 = vunpack.c.h.b16 %v2039
    %v2230 = vunpack.c.l.b16 %v2040
    %v2231 = vunpack.c.h.b16 %v2040
    %v2232 = vunpack.c.l.b16 %v2041
    %v2233 = vunpack.c.h.b16 %v2041
    %v2234 = vunpack.c.l.b16 %v2042
    %v2235 = vunpack.c.h.b16 %v2042
    %v2236 = vunpack.c.l.b16 %v2043
    %v2237 = vunpack.c.h.b16 %v2043
    %v2238 = vunpack.c.l.b16 %v2044
    %v2239 = vunpack.c.h.b16 %v2044
    %v2240 = vunpack.c.l.b16 %v2045
    %v2241 = vunpack.c.h.b16 %v2045
    %v2242 = vunpack.c.l.b16 %v2046
    %v2243 = vunpack.c.h.b16 %v2046
    %v2244 = vunpack.c.l.b16 %v2047
    %v2245 = vunpack.c.h.b16 %v2047
    %v2246 = vunpack.c.l.b16 %v2048
    %v2247 = vunpack.c.h.b16 %v2048
    %v2248 = vunpack.c.l.b16 %v2049
    %v2249 = vunpack.c.h.b16 %v2049
    %v2250 = vunpack.c.l.b16 %v2050
    %v2251 = vunpack.c.h.b16 %v2050
    %v2252 = vunpack.c.l.b16 %v2051
    %v2253 = vunpack.c.h.b16 %v2051
    %v2254 = vunpack.c.l.b16 %v2052
    %v2255 = vunpack.c.h.b16 %v2052
    %v2256 = vunpack.c.l.b16 %v2053
    %v2257 = vunpack.c.h.b16 %v2053
    %v2258 = vunpack.c.l.b16 %v2054
    %v2259 = vunpack.c.h.b16 %v2054
    %v2260 = vunpack.c.l.b16 %v2055
    %v2261 = vunpack.c.h.b16 %v2055
    %v2262 = vunpack.c.l.b16 %v2056
    %v2263 = vunpack.c.h.b16 %v2056
    %v2264 = vunpack.c.l.b16 %v2057
    %v2265 = vunpack.c.h.b16 %v2057
    %v2266 = vpack.c.b16 %v2140, %v2138
    %v2267 = vpack.c.b16 %v2141, %v2139
    %v2268 = vpack.c.b16 %v2144, %v2142
    %v2269 = vpack.c.b16 %v2145, %v2143
    %v2270 = vpack.c.b16 %v2148, %v2146
    %v2271 = vpack.c.b16 %v2149, %v2147
    %v2272 = vpack.c.b16 %v2152, %v2150
    %v2273 = vpack.c.b16 %v2153, %v2151
    %v2274 = vpack.c.b16 %v2156, %v2154
    %v2275 = vpack.c.b16 %v2157, %v2155
    %v2276 = vpack.c.b16 %v2160, %v2158
    %v2277 = vpack.c.b16 %v2161, %v2159
    %v2278 = vpack.c.b16 %v2164, %v2162
    %v2279 = vpack.c.b16 %v2165, %v2163
    %v2280 = vpack.c.b16 %v2168, %v2166
    %v2281 = vpack.c.b16 %v2169, %v2167
    %v2282 = vpack.c.b16 %v2172, %v2170
    %v2283 = vpack.c.b16 %v2173, %v2171
    %v2284 = vpack.c.b16 %v2176, %v2174
    %v2285 = vpack.c.b16 %v2177, %v2175
    %v2286 = vpack.c.b16 %v2180, %v2178
    %v2287 = vpack.c.b16 %v2181, %v2179
    %v2288 = vpack.c.b16 %v2184, %v2182
    %v2289 = vpack.c.b16 %v2185, %v2183
    %v2290 = vpack.c.b16 %v2188, %v2186
    %v2291 = vpack.c.b16 %v2189, %v2187
    %v2292 = vpack.c.b16 %v2192, %v2190
    %v2293 = vpack.c.b16 %v2193, %v2191
    %v2294 = vpack.c.b16 %v2196, %v2194
    %v2295 = vpack.c.b16 %v2197, %v2195
    %v2296 = vpack.c.b16 %v2200, %v2198
    %v2297 = vpack.c.b16 %v2201, %v2199
    %v2298 = vpack.c.b16 %v2204, %v2202
    %v2299 = vpack.c.b16 %v2205, %v2203
    %v2300 = vpack.c.b16 %v2208, %v2206
    %v2301 = vpack.c.b16 %v2209, %v2207
    %v2302 = vpack.c.b16 %v2212, %v2210
    %v2303 = vpack.c.b16 %v2213, %v2211
    %v2304 = vpack.c.b16 %v2216, %v2214
    %v2305 = vpack.c.b16 %v2217, %v2215
    %v2306 = vpack.c.b16 %v2220, %v2218
    %v2307 = vpack.c.b16 %v2221, %v2219
    %v2308 = vpack.c.b16 %v2224, %v2222
    %v2309 = vpack.c.b16 %v2225, %v2223
    %v2310 = vpack.c.b16 %v2228, %v2226
    %v2311 = vpack.c.b16 %v2229, %v2227
    %v2312 = vpack.c.b16 %v2232, %v2230
    %v2313 = vpack.c.b16 %v2233, %v2231
    %v2314 = vpack.c.b16 %v2236, %v2234
    %v2315 = vpack.c.b16 %v2237, %v2235
    %v2316 = vpack.c.b16 %v2240, %v2238
    %v2317 = vpack.c.b16 %v2241, %v2239
    %v2318 = vpack.c.b16 %v2244, %v2242
    %v2319 = vpack.c.b16 %v2245, %v2243
    %v2320 = vpack.c.b16 %v2248, %v2246
    %v2321 = vpack.c.b16 %v2249, %v2247
    %v2322 = vpack.c.b16 %v2252, %v2250
    %v2323 = vpack.c.b16 %v2253, %v2251
    %v2324 = vpack.c.b16 %v2256, %v2254
    %v2325 = vpack.c.b16 %v2257, %v2255
    %v2326 = vpack.c.b16 %v2260, %v2258
    %v2327 = vpack.c.b16 %v2261, %v2259
    %v2328 = vpack.c.b16 %v2264, %v2262
    %v2329 = vpack.c.b16 %v2265, %v2263
    %2394 = vmatprep.subr.bf16.mxu0 %v2267
    %2395 = vmatpush1.bf16.msra.mxu0 %v2266
    %2396 = vmatprep.subr.bf16.mxu0 %v2269
    %2397 = vmatpush1.bf16.msra.mxu0 %v2268
    %2398 = vmatprep.subr.bf16.mxu0 %v2271
    %2399 = vmatpush1.bf16.msra.mxu0 %v2270
    %2400 = vmatprep.subr.bf16.mxu0 %v2273
    %2401 = vmatpush1.bf16.msra.mxu0 %v2272
    %2402 = vmatprep.subr.bf16.mxu0 %v2275
    %2403 = vmatpush1.bf16.msra.mxu0 %v2274
    %2404 = vmatprep.subr.bf16.mxu0 %v2277
    %2405 = vmatpush1.bf16.msra.mxu0 %v2276
    %2406 = vmatprep.subr.bf16.mxu0 %v2279
    %2407 = vmatpush1.bf16.msra.mxu0 %v2278
    %2408 = vmatprep.subr.bf16.mxu0 %v2281
    %2409 = vmatpush1.bf16.msra.mxu0 %v2280
    %2410 = vmatprep.subr.bf16.mxu0 %v2283
    %2411 = vmatpush1.bf16.msra.mxu0 %v2282
    %2412 = vmatprep.subr.bf16.mxu0 %v2285
    %2413 = vmatpush1.bf16.msra.mxu0 %v2284
    %2414 = vmatprep.subr.bf16.mxu0 %v2287
    %2415 = vmatpush1.bf16.msra.mxu0 %v2286
    %2416 = vmatprep.subr.bf16.mxu0 %v2289
    %2417 = vmatpush1.bf16.msra.mxu0 %v2288
    %2418 = vmatprep.subr.bf16.mxu0 %v2291
    %2419 = vmatpush1.bf16.msra.mxu0 %v2290
    %2420 = vmatprep.subr.bf16.mxu0 %v2293
    %2421 = vmatpush1.bf16.msra.mxu0 %v2292
    %2422 = vmatprep.subr.bf16.mxu0 %v2295
    %2423 = vmatpush1.bf16.msra.mxu0 %v2294
    %2424 = vmatprep.subr.bf16.mxu0 %v2297
    %2425 = vmatpush1.bf16.msra.mxu0 %v2296
    %2426 = vmatprep.mubr.bf16.mxu0 %v2060
    %2427 = vmatmul.mubr.bf16.gmra.mrb[0].mxu0 %v2059
    %v2428 = vpop.f32.mrb[0].mxu0
    %v2429 = vadd.f32 %v2067, %v2428
    %v2430 = vpop.f32.mrb[0].mxu0
    %v2431 = vadd.f32 %v2071, %v2430
    %v2432 = vpop.f32.mrb[0].mxu0
    %v2433 = vpop.f32.mrb[0].mxu0
    %2434 = vdwg.mxu0
    %2435 = vmatprep.subr.bf16.mxu0 %v2299
    %2436 = vmatpush1.bf16.msra.mxu0 %v2298
    %2437 = vmatprep.subr.bf16.mxu0 %v2301
    %2438 = vmatpush1.bf16.msra.mxu0 %v2300
    %2439 = vmatprep.subr.bf16.mxu0 %v2303
    %2440 = vmatpush1.bf16.msra.mxu0 %v2302
    %2441 = vmatprep.subr.bf16.mxu0 %v2305
    %2442 = vmatpush1.bf16.msra.mxu0 %v2304
    %2443 = vmatprep.subr.bf16.mxu0 %v2307
    %2444 = vmatpush1.bf16.msra.mxu0 %v2306
    %2445 = vmatprep.subr.bf16.mxu0 %v2309
    %2446 = vmatpush1.bf16.msra.mxu0 %v2308
    %2447 = vmatprep.subr.bf16.mxu0 %v2311
    %2448 = vmatpush1.bf16.msra.mxu0 %v2310
    %2449 = vmatprep.subr.bf16.mxu0 %v2313
    %2450 = vmatpush1.bf16.msra.mxu0 %v2312
    %2451 = vmatprep.subr.bf16.mxu0 %v2315
    %2452 = vmatpush1.bf16.msra.mxu0 %v2314
    %2453 = vmatprep.subr.bf16.mxu0 %v2317
    %2454 = vmatpush1.bf16.msra.mxu0 %v2316
    %2455 = vmatprep.subr.bf16.mxu0 %v2319
    %2456 = vmatpush1.bf16.msra.mxu0 %v2318
    %2457 = vmatprep.subr.bf16.mxu0 %v2321
    %2458 = vmatpush1.bf16.msra.mxu0 %v2320
    %2459 = vmatprep.subr.bf16.mxu0 %v2323
    %2460 = vmatpush1.bf16.msra.mxu0 %v2322
    %2461 = vmatprep.subr.bf16.mxu0 %v2325
    %2462 = vmatpush1.bf16.msra.mxu0 %v2324
    %2463 = vmatprep.subr.bf16.mxu0 %v2327
    %2464 = vmatpush1.bf16.msra.mxu0 %v2326
    %2465 = vmatprep.subr.bf16.mxu0 %v2329
    %2466 = vmatpush1.bf16.msra.mxu0 %v2328
    %2467 = vmatprep.mubr.bf16.mxu0 %v2062
    %2468 = vmatmul.mubr.bf16.gmra.mrb[0].mxu0 %v2061
    %v2469 = vpop.f32.mrb[0].mxu0
    %v2470 = vadd.f32 %v2429, %v2469
    %v2471 = vpop.f32.mrb[0].mxu0
    %v2472 = vadd.f32 %v2431, %v2471
    %v2473 = vpop.f32.mrb[0].mxu0
    %v2474 = vpop.f32.mrb[0].mxu0
    %2475 = vdwg.mxu0
    %v2476 = vmax.f32 %v2470, 0.0
    %v2477 = vmax.f32 %v2472, 0.0
    %v2478 = vld [vmem:[%s5] sm:$0xf]
    %v2479 = vld [vmem:[%s5 + $0x4] sm:$0xf]
    %v2480 = vld [vmem:[%s5 + $0x8] sm:$0xf]
    %v2481 = vld [vmem:[%s5 + $0xc] sm:$0xf]
    %v2482 = vld [vmem:[%s5 + $0x10] sm:$0xf]
    %v2483 = vld [vmem:[%s5 + $0x14] sm:$0xf]
    %v2484 = vld [vmem:[%s5 + $0x18] sm:$0xf]
    %v2485 = vld [vmem:[%s5 + $0x1c] sm:$0xf]
    %v2486 = vld [vmem:[%s5 + $0x20] sm:$0xf]
    %v2487 = vld [vmem:[%s5 + $0x24] sm:$0xf]
    %v2488 = vld [vmem:[%s5 + $0x28] sm:$0xf]
    %v2489 = vld [vmem:[%s5 + $0x2c] sm:$0xf]
    %v2490 = vld [vmem:[%s5 + $0x30] sm:$0xf]
    %v2491 = vld [vmem:[%s5 + $0x34] sm:$0xf]
    %v2492 = vld [vmem:[%s5 + $0x38] sm:$0xf]
    %v2493 = vld [vmem:[%s5 + $0x3c] sm:$0xf]
    %v2494 = vld [vmem:[%s5 + $0x40] sm:$0xf]
    %v2495 = vld [vmem:[%s5 + $0x44] sm:$0xf]
    %v2496 = vld [vmem:[%s5 + $0x48] sm:$0xf]
    %v2497 = vld [vmem:[%s5 + $0x4c] sm:$0xf]
    %v2498 = vld [vmem:[%s5 + $0x50] sm:$0xf]
    %v2499 = vld [vmem:[%s5 + $0x54] sm:$0xf]
    %v2500 = vld [vmem:[%s5 + $0x58] sm:$0xf]
    %v2501 = vld [vmem:[%s5 + $0x5c] sm:$0xf]
    %v2502 = vld [vmem:[%s5 + $0x60] sm:$0xf]
    %v2503 = vld [vmem:[%s5 + $0x64] sm:$0xf]
    %v2504 = vld [vmem:[%s5 + $0x68] sm:$0xf]
    %v2505 = vld [vmem:[%s5 + $0x6c] sm:$0xf]
    %v2506 = vld [vmem:[%s5 + $0x70] sm:$0xf]
    %v2507 = vld [vmem:[%s5 + $0x74] sm:$0xf]
    %v2508 = vld [vmem:[%s5 + $0x78] sm:$0xf]
    %v2509 = vld [vmem:[%s5 + $0x7c] sm:$0xf]
    %v2510 = vld [vmem:[%s6] sm:$0x1]
    %v2511 = vpack.c.bf16 %v2476, %v2476
    %v2512 = vpack.c.bf16 %v2477, %v2477
    %v2514 = vlaneseq
    %v2515 = vshrl.u32 %v2514, 7
    %v2516 = vsub.s32 0, %v2515
    %v2517 = vrot.slane %v2510, %v2516
    %v2551 = vunpack.c.l.b16 %v2478
    %v2552 = vunpack.c.l.b16 %v2479
    %v2553 = vunpack.c.l.b16 %v2480
    %v2554 = vunpack.c.l.b16 %v2481
    %v2555 = vunpack.c.l.b16 %v2482
    %v2556 = vunpack.c.l.b16 %v2483
    %v2557 = vunpack.c.l.b16 %v2484
    %v2558 = vunpack.c.l.b16 %v2485
    %v2559 = vunpack.c.l.b16 %v2486
    %v2560 = vunpack.c.l.b16 %v2487
    %v2561 = vunpack.c.l.b16 %v2488
    %v2562 = vunpack.c.l.b16 %v2489
    %v2563 = vunpack.c.l.b16 %v2490
    %v2564 = vunpack.c.l.b16 %v2491
    %v2565 = vunpack.c.l.b16 %v2492
    %v2566 = vunpack.c.l.b16 %v2493
    %v2567 = vunpack.c.l.b16 %v2494
    %v2568 = vunpack.c.l.b16 %v2495
    %v2569 = vunpack.c.l.b16 %v2496
    %v2570 = vunpack.c.l.b16 %v2497
    %v2571 = vunpack.c.l.b16 %v2498
    %v2572 = vunpack.c.l.b16 %v2499
    %v2573 = vunpack.c.l.b16 %v2500
    %v2574 = vunpack.c.l.b16 %v2501
    %v2575 = vunpack.c.l.b16 %v2502
    %v2576 = vunpack.c.l.b16 %v2503
    %v2577 = vunpack.c.l.b16 %v2504
    %v2578 = vunpack.c.l.b16 %v2505
    %v2579 = vunpack.c.l.b16 %v2506
    %v2580 = vunpack.c.l.b16 %v2507
    %v2581 = vunpack.c.l.b16 %v2508
    %v2582 = vunpack.c.l.b16 %v2509
    %v2583 = vpack.c.b16 %v2552, %v2551
    %v2584 = vpack.c.b16 %v2554, %v2553
    %v2585 = vpack.c.b16 %v2556, %v2555
    %v2586 = vpack.c.b16 %v2558, %v2557
    %v2587 = vpack.c.b16 %v2560, %v2559
    %v2588 = vpack.c.b16 %v2562, %v2561
    %v2589 = vpack.c.b16 %v2564, %v2563
    %v2590 = vpack.c.b16 %v2566, %v2565
    %v2591 = vpack.c.b16 %v2568, %v2567
    %v2592 = vpack.c.b16 %v2570, %v2569
    %v2593 = vpack.c.b16 %v2572, %v2571
    %v2594 = vpack.c.b16 %v2574, %v2573
    %v2595 = vpack.c.b16 %v2576, %v2575
    %v2596 = vpack.c.b16 %v2578, %v2577
    %v2597 = vpack.c.b16 %v2580, %v2579
    %v2598 = vpack.c.b16 %v2582, %v2581
    %2615 = vmatprep.subr.bf16.mxu0 0
    %2616 = vmatpush1.bf16.msra.mxu0 %v2583
    %2617 = vmatprep.subr.bf16.mxu0 0
    %2618 = vmatpush1.bf16.msra.mxu0 %v2584
    %2619 = vmatprep.subr.bf16.mxu0 0
    %2620 = vmatpush1.bf16.msra.mxu0 %v2585
    %2621 = vmatprep.subr.bf16.mxu0 0
    %2622 = vmatpush1.bf16.msra.mxu0 %v2586
    %2623 = vmatprep.subr.bf16.mxu0 0
    %2624 = vmatpush1.bf16.msra.mxu0 %v2587
    %2625 = vmatprep.subr.bf16.mxu0 0
    %2626 = vmatpush1.bf16.msra.mxu0 %v2588
    %2627 = vmatprep.subr.bf16.mxu0 0
    %2628 = vmatpush1.bf16.msra.mxu0 %v2589
    %2629 = vmatprep.subr.bf16.mxu0 0
    %2630 = vmatpush1.bf16.msra.mxu0 %v2590
    %2631 = vmatprep.subr.bf16.mxu0 0
    %2632 = vmatpush1.bf16.msra.mxu0 %v2591
    %2633 = vmatprep.subr.bf16.mxu0 0
    %2634 = vmatpush1.bf16.msra.mxu0 %v2592
    %2635 = vmatprep.subr.bf16.mxu0 0
    %2636 = vmatpush1.bf16.msra.mxu0 %v2593
    %2637 = vmatprep.subr.bf16.mxu0 0
    %2638 = vmatpush1.bf16.msra.mxu0 %v2594
    %2639 = vmatprep.subr.bf16.mxu0 0
    %2640 = vmatpush1.bf16.msra.mxu0 %v2595
    %2641 = vmatprep.subr.bf16.mxu0 0
    %2642 = vmatpush1.bf16.msra.mxu0 %v2596
    %2643 = vmatprep.subr.bf16.mxu0 0
    %2644 = vmatpush1.bf16.msra.mxu0 %v2597
    %2645 = vmatprep.subr.bf16.mxu0 0
    %2646 = vmatpush1.bf16.msra.mxu0 %v2598
    %2647 = vmatprep.mubr.bf16.mxu0 %v2512
    %2648 = vmatmul.mubr.bf16.gmra.mrb[0].mxu0 %v2511
    %v2649 = vpop.f32.mrb[0].mxu0
    %v2650 = vadd.f32 %v2517, %v2649
    %v2651 = vpop.f32.mrb[0].mxu0
    %v2652 = vpop.f32.mrb[0].mxu0
    %v2653 = vpop.f32.mrb[0].mxu0
    %2654 = vdwg.mxu0
    %v2655 = vmax.f32 %v2650, 0.0
    %v2656 = vld [vmem:[%s7] sm:$0xff]
    %v2657 = vld [vmem:[%s7 + $0x8] sm:$0xff]
    %v2658 = vld [vmem:[%s7 + $0x10] sm:$0xff]
    %v2659 = vld [vmem:[%s7 + $0x18] sm:$0xff]
    %v2660 = vld [vmem:[%s7 + $0x20] sm:$0xff]
    %v2661 = vld [vmem:[%s7 + $0x28] sm:$0xff]
    %v2662 = vld [vmem:[%s7 + $0x30] sm:$0xff]
    %v2663 = vld [vmem:[%s7 + $0x38] sm:$0xff]
    %v2664 = vld [vmem:[%s7 + $0x40] sm:$0xff]
    %v2665 = vld [vmem:[%s7 + $0x48] sm:$0xff]
    %v2666 = vld [vmem:[%s7 + $0x50] sm:$0xff]
    %v2667 = vld [vmem:[%s7 + $0x58] sm:$0xff]
    %v2668 = vld [vmem:[%s7 + $0x60] sm:$0xff]
    %v2669 = vld [vmem:[%s7 + $0x68] sm:$0xff]
    %v2670 = vld [vmem:[%s7 + $0x70] sm:$0xff]
    %v2671 = vld [vmem:[%s7 + $0x78] sm:$0xff]
    %v2672 = vld [vmem:[%s10] sm:$0xff]
    %v2673 = vld [vmem:[#allocation4] sm:$0xff]
    %v2674 = vld [vmem:[#allocation4 + $0x8] sm:$0xff]
    %v2675 = vld [vmem:[#allocation4 + $0x10] sm:$0xff]
    %v2676 = vld [vmem:[#allocation4 + $0x18] sm:$0xff]
    %v2677 = vld [vmem:[#allocation4 + $0x20] sm:$0xff]
    %v2678 = vld [vmem:[#allocation4 + $0x28] sm:$0xff]
    %v2679 = vld [vmem:[#allocation4 + $0x30] sm:$0xff]
    %v2680 = vld [vmem:[#allocation4 + $0x38] sm:$0xff]
    %v2681 = vld [vmem:[#allocation4 + $0x40] sm:$0xff]
    %v2682 = vld [vmem:[#allocation4 + $0x48] sm:$0xff]
    %v2683 = vld [vmem:[#allocation4 + $0x50] sm:$0xff]
    %v2684 = vld [vmem:[#allocation4 + $0x58] sm:$0xff]
    %v2685 = vld [vmem:[#allocation4 + $0x60] sm:$0xff]
    %v2686 = vld [vmem:[#allocation4 + $0x68] sm:$0xff]
    %v2687 = vld [vmem:[#allocation4 + $0x70] sm:$0xff]
    %v2688 = vld [vmem:[#allocation4 + $0x78] sm:$0xff]
    %v2689 = vld [vmem:[#allocation4 + $0x80] sm:$0xff]
    %v2690 = vld [vmem:[#allocation4 + $0x88] sm:$0xff]
    %v2691 = vld [vmem:[#allocation4 + $0x90] sm:$0xff]
    %v2692 = vld [vmem:[#allocation4 + $0x98] sm:$0xff]
    %v2693 = vld [vmem:[#allocation4 + $0xa0] sm:$0xff]
    %v2694 = vld [vmem:[#allocation4 + $0xa8] sm:$0xff]
    %v2695 = vld [vmem:[#allocation4 + $0xb0] sm:$0xff]
    %v2696 = vld [vmem:[#allocation4 + $0xb8] sm:$0xff]
    %v2697 = vld [vmem:[#allocation4 + $0xc0] sm:$0xff]
    %v2698 = vld [vmem:[#allocation4 + $0xc8] sm:$0xff]
    %v2699 = vld [vmem:[#allocation4 + $0xd0] sm:$0xff]
    %v2700 = vld [vmem:[#allocation4 + $0xd8] sm:$0xff]
    %v2701 = vld [vmem:[#allocation4 + $0xe0] sm:$0xff]
    %v2702 = vld [vmem:[#allocation4 + $0xe8] sm:$0xff]
    %v2703 = vld [vmem:[#allocation4 + $0xf0] sm:$0xff]
    %v2704 = vld [vmem:[#allocation4 + $0xf8] sm:$0xff]
    %v2705 = vld [vmem:[#allocation4 + $0x100] sm:$0xff]
    %v2706 = vld [vmem:[#allocation4 + $0x108] sm:$0xff]
    %v2707 = vld [vmem:[#allocation4 + $0x110] sm:$0xff]
    %v2708 = vld [vmem:[#allocation4 + $0x118] sm:$0xff]
    %v2709 = vld [vmem:[#allocation4 + $0x120] sm:$0xff]
    %v2710 = vld [vmem:[#allocation4 + $0x128] sm:$0xff]
    %v2711 = vld [vmem:[#allocation4 + $0x130] sm:$0xff]
    %v2712 = vld [vmem:[#allocation4 + $0x138] sm:$0xff]
    %v2713 = vld [vmem:[#allocation4 + $0x140] sm:$0xff]
    %v2714 = vld [vmem:[#allocation4 + $0x148] sm:$0xff]
    %v2715 = vld [vmem:[#allocation4 + $0x150] sm:$0xff]
    %v2716 = vld [vmem:[#allocation4 + $0x158] sm:$0xff]
    %v2717 = vld [vmem:[#allocation4 + $0x160] sm:$0xff]
    %v2718 = vld [vmem:[#allocation4 + $0x168] sm:$0xff]
    %v2719 = vld [vmem:[#allocation4 + $0x170] sm:$0xff]
    %v2720 = vld [vmem:[#allocation4 + $0x178] sm:$0xff]
    %v2721 = vld [vmem:[#allocation4 + $0x180] sm:$0xff]
    %v2722 = vld [vmem:[#allocation4 + $0x188] sm:$0xff]
    %v2723 = vld [vmem:[#allocation4 + $0x190] sm:$0xff]
    %v2724 = vld [vmem:[#allocation4 + $0x198] sm:$0xff]
    %v2725 = vld [vmem:[#allocation4 + $0x1a0] sm:$0xff]
    %v2726 = vld [vmem:[#allocation4 + $0x1a8] sm:$0xff]
    %v2727 = vld [vmem:[#allocation4 + $0x1b0] sm:$0xff]
    %v2728 = vld [vmem:[#allocation4 + $0x1b8] sm:$0xff]
    %v2729 = vld [vmem:[#allocation4 + $0x1c0] sm:$0xff]
    %v2730 = vld [vmem:[#allocation4 + $0x1c8] sm:$0xff]
    %v2731 = vld [vmem:[#allocation4 + $0x1d0] sm:$0xff]
    %v2732 = vld [vmem:[#allocation4 + $0x1d8] sm:$0xff]
    %v2733 = vld [vmem:[#allocation4 + $0x1e0] sm:$0xff]
    %v2734 = vld [vmem:[#allocation4 + $0x1e8] sm:$0xff]
    %v2735 = vld [vmem:[#allocation4 + $0x1f0] sm:$0xff]
    %v2736 = vld [vmem:[#allocation4 + $0x1f8] sm:$0xff]
    %2737 = vmatprep.subr.mxu0 %v2674
    %2738 = vmatpush1.msra.mxu0 %v2673
    %2739 = vmatprep.subr.mxu0 %v2678
    %2740 = vmatpush1.msra.mxu0 %v2677
    %2741 = vmatprep.subr.mxu0 %v2682
    %2742 = vmatpush1.msra.mxu0 %v2681
    %2743 = vmatprep.subr.mxu0 %v2686
    %2744 = vmatpush1.msra.mxu0 %v2685
    %2745 = vmatprep.subr.mxu0 %v2690
    %2746 = vmatpush1.msra.mxu0 %v2689
    %2747 = vmatprep.subr.mxu0 %v2694
    %2748 = vmatpush1.msra.mxu0 %v2693
    %2749 = vmatprep.subr.mxu0 %v2698
    %2750 = vmatpush1.msra.mxu0 %v2697
    %2751 = vmatprep.subr.mxu0 %v2702
    %2752 = vmatpush1.msra.mxu0 %v2701
    %2753 = vmatprep.subr.mxu0 %v2706
    %2754 = vmatpush1.msra.mxu0 %v2705
    %2755 = vmatprep.subr.mxu0 %v2710
    %2756 = vmatpush1.msra.mxu0 %v2709
    %2757 = vmatprep.subr.mxu0 %v2714
    %2758 = vmatpush1.msra.mxu0 %v2713
    %2759 = vmatprep.subr.mxu0 %v2718
    %2760 = vmatpush1.msra.mxu0 %v2717
    %2761 = vmatprep.subr.mxu0 %v2722
    %2762 = vmatpush1.msra.mxu0 %v2721
    %2763 = vmatprep.subr.mxu0 %v2726
    %2764 = vmatpush1.msra.mxu0 %v2725
    %2765 = vmatprep.subr.mxu0 %v2730
    %2766 = vmatpush1.msra.mxu0 %v2729
    %2767 = vmatprep.subr.mxu0 %v2734
    %2768 = vmatpush1.msra.mxu0 %v2733
    %2769 = vmatprep.subr.mxu0 0.0
    %2770 = vmatpush1.msra.mxu0 0.0
    %2771 = vmatprep.subr.mxu0 0.0
    %2772 = vmatpush1.msra.mxu0 0.0
    %2773 = vmatprep.subr.mxu0 0.0
    %2774 = vmatpush1.msra.mxu0 0.0
    %2775 = vmatprep.subr.mxu0 0.0
    %2776 = vmatpush1.msra.mxu0 0.0
    %2777 = vmatprep.subr.mxu0 0.0
    %2778 = vmatpush1.msra.mxu0 0.0
    %2779 = vmatprep.subr.mxu0 0.0
    %2780 = vmatpush1.msra.mxu0 0.0
    %2781 = vmatprep.subr.mxu0 0.0
    %2782 = vmatpush1.msra.mxu0 0.0
    %2783 = vmatprep.subr.mxu0 0.0
    %2784 = vmatpush1.msra.mxu0 0.0
    %2785 = vmatprep.subr.mxu0 0.0
    %2786 = vmatpush1.msra.mxu0 0.0
    %2787 = vmatprep.subr.mxu0 0.0
    %2788 = vmatpush1.msra.mxu0 0.0
    %2789 = vmatprep.subr.mxu0 0.0
    %2790 = vmatpush1.msra.mxu0 0.0
    %2791 = vmatprep.subr.mxu0 0.0
    %2792 = vmatpush1.msra.mxu0 0.0
    %2793 = vmatprep.subr.mxu0 0.0
    %2794 = vmatpush1.msra.mxu0 0.0
    %2795 = vmatprep.subr.mxu0 0.0
    %2796 = vmatpush1.msra.mxu0 0.0
    %2797 = vmatprep.subr.mxu0 0.0
    %2798 = vmatpush1.msra.mxu0 0.0
    %2799 = vmatprep.subr.mxu0 0.0
    %2800 = vmatpush1.msra.mxu0 0.0
    %2801 = vmatprep.mubr.f32.mxu0 0.0
    %2802 = vmatmul.mubr.f32.gmra.mrb[0].mxu0 %v2672
    %v2803 = vpop.f32.mrb[0].mxu0
    %v2804 = vadd.f32 0.0, %v2803
    %v2805 = vpop.f32.mrb[0].mxu0
    %v2806 = vadd.f32 0.0, %v2805
    %2807 = vdwg.mxu0
    %2808 = vmatprep.subr.mxu0 %v2676
    %2809 = vmatpush1.msra.mxu0 %v2675
    %2810 = vmatprep.subr.mxu0 %v2680
    %2811 = vmatpush1.msra.mxu0 %v2679
    %2812 = vmatprep.subr.mxu0 %v2684
    %2813 = vmatpush1.msra.mxu0 %v2683
    %2814 = vmatprep.subr.mxu0 %v2688
    %2815 = vmatpush1.msra.mxu0 %v2687
    %2816 = vmatprep.subr.mxu0 %v2692
    %2817 = vmatpush1.msra.mxu0 %v2691
    %2818 = vmatprep.subr.mxu0 %v2696
    %2819 = vmatpush1.msra.mxu0 %v2695
    %2820 = vmatprep.subr.mxu0 %v2700
    %2821 = vmatpush1.msra.mxu0 %v2699
    %2822 = vmatprep.subr.mxu0 %v2704
    %2823 = vmatpush1.msra.mxu0 %v2703
    %2824 = vmatprep.subr.mxu0 %v2708
    %2825 = vmatpush1.msra.mxu0 %v2707
    %2826 = vmatprep.subr.mxu0 %v2712
    %2827 = vmatpush1.msra.mxu0 %v2711
    %2828 = vmatprep.subr.mxu0 %v2716
    %2829 = vmatpush1.msra.mxu0 %v2715
    %2830 = vmatprep.subr.mxu0 %v2720
    %2831 = vmatpush1.msra.mxu0 %v2719
    %2832 = vmatprep.subr.mxu0 %v2724
    %2833 = vmatpush1.msra.mxu0 %v2723
    %2834 = vmatprep.subr.mxu0 %v2728
    %2835 = vmatpush1.msra.mxu0 %v2727
    %2836 = vmatprep.subr.mxu0 %v2732
    %2837 = vmatpush1.msra.mxu0 %v2731
    %2838 = vmatprep.subr.mxu0 %v2736
    %2839 = vmatpush1.msra.mxu0 %v2735
    %2840 = vmatprep.subr.mxu0 0.0
    %2841 = vmatpush1.msra.mxu0 0.0
    %2842 = vmatprep.subr.mxu0 0.0
    %2843 = vmatpush1.msra.mxu0 0.0
    %2844 = vmatprep.subr.mxu0 0.0
    %2845 = vmatpush1.msra.mxu0 0.0
    %2846 = vmatprep.subr.mxu0 0.0
    %2847 = vmatpush1.msra.mxu0 0.0
    %2848 = vmatprep.subr.mxu0 0.0
    %2849 = vmatpush1.msra.mxu0 0.0
    %2850 = vmatprep.subr.mxu0 0.0
    %2851 = vmatpush1.msra.mxu0 0.0
    %2852 = vmatprep.subr.mxu0 0.0
    %2853 = vmatpush1.msra.mxu0 0.0
    %2854 = vmatprep.subr.mxu0 0.0
    %2855 = vmatpush1.msra.mxu0 0.0
    %2856 = vmatprep.subr.mxu0 0.0
    %2857 = vmatpush1.msra.mxu0 0.0
    %2858 = vmatprep.subr.mxu0 0.0
    %2859 = vmatpush1.msra.mxu0 0.0
    %2860 = vmatprep.subr.mxu0 0.0
    %2861 = vmatpush1.msra.mxu0 0.0
    %2862 = vmatprep.subr.mxu0 0.0
    %2863 = vmatpush1.msra.mxu0 0.0
    %2864 = vmatprep.subr.mxu0 0.0
    %2865 = vmatpush1.msra.mxu0 0.0
    %2866 = vmatprep.subr.mxu0 0.0
    %2867 = vmatpush1.msra.mxu0 0.0
    %2868 = vmatprep.subr.mxu0 0.0
    %2869 = vmatpush1.msra.mxu0 0.0
    %2870 = vmatprep.subr.mxu0 0.0
    %2871 = vmatpush1.msra.mxu0 0.0
    %2872 = vmatprep.mubr.f32.mxu0 0.0
    %2873 = vmatmul.mubr.f32.gmra.mrb[0].mxu0 %v2672
    %v2874 = vpop.f32.mrb[0].mxu0
    %v2875 = vadd.f32 0.0, %v2874
    %v2876 = vpop.f32.mrb[0].mxu0
    %v2877 = vadd.f32 0.0, %v2876
    %2878 = vdwg.mxu0
    %vm2879 = vcmask 261120
    %v2881 = vsel %vm2879, %v2655, 0
    %2883 = vmatprep.subr.mxu0 %v2657
    %2884 = vmatpush1.msra.mxu0 %v2656
    %2885 = vmatprep.subr.mxu0 %v2661
    %2886 = vmatpush1.msra.mxu0 %v2660
    %2887 = vmatprep.subr.mxu0 %v2665
    %2888 = vmatpush1.msra.mxu0 %v2664
    %2889 = vmatprep.subr.mxu0 %v2669
    %2890 = vmatpush1.msra.mxu0 %v2668
    %2891 = vmatprep.subr.mxu0 0.0
    %2892 = vmatpush1.msra.mxu0 0.0
    %2893 = vmatprep.subr.mxu0 0.0
    %2894 = vmatpush1.msra.mxu0 0.0
    %2895 = vmatprep.subr.mxu0 0.0
    %2896 = vmatpush1.msra.mxu0 0.0
    %2897 = vmatprep.subr.mxu0 0.0
    %2898 = vmatpush1.msra.mxu0 0.0
    %2899 = vmatprep.subr.mxu0 0.0
    %2900 = vmatpush1.msra.mxu0 0.0
    %2901 = vmatprep.subr.mxu0 0.0
    %2902 = vmatpush1.msra.mxu0 0.0
    %2903 = vmatprep.subr.mxu0 0.0
    %2904 = vmatpush1.msra.mxu0 0.0
    %2905 = vmatprep.subr.mxu0 0.0
    %2906 = vmatpush1.msra.mxu0 0.0
    %2907 = vmatprep.subr.mxu0 0.0
    %2908 = vmatpush1.msra.mxu0 0.0
    %2909 = vmatprep.subr.mxu0 0.0
    %2910 = vmatpush1.msra.mxu0 0.0
    %2911 = vmatprep.subr.mxu0 0.0
    %2912 = vmatpush1.msra.mxu0 0.0
    %2913 = vmatprep.subr.mxu0 0.0
    %2914 = vmatpush1.msra.mxu0 0.0
    %2915 = vmatprep.subr.mxu0 0.0
    %2916 = vmatpush1.msra.mxu0 0.0
    %2917 = vmatprep.subr.mxu0 0.0
    %2918 = vmatpush1.msra.mxu0 0.0
    %2919 = vmatprep.subr.mxu0 0.0
    %2920 = vmatpush1.msra.mxu0 0.0
    %2921 = vmatprep.subr.mxu0 0.0
    %2922 = vmatpush1.msra.mxu0 0.0
    %2923 = vmatprep.subr.mxu0 0.0
    %2924 = vmatpush1.msra.mxu0 0.0
    %2925 = vmatprep.subr.mxu0 0.0
    %2926 = vmatpush1.msra.mxu0 0.0
    %2927 = vmatprep.subr.mxu0 0.0
    %2928 = vmatpush1.msra.mxu0 0.0
    %2929 = vmatprep.subr.mxu0 0.0
    %2930 = vmatpush1.msra.mxu0 0.0
    %2931 = vmatprep.subr.mxu0 0.0
    %2932 = vmatpush1.msra.mxu0 0.0
    %2933 = vmatprep.subr.mxu0 0.0
    %2934 = vmatpush1.msra.mxu0 0.0
    %2935 = vmatprep.subr.mxu0 0.0
    %2936 = vmatpush1.msra.mxu0 0.0
    %2937 = vmatprep.subr.mxu0 0.0
    %2938 = vmatpush1.msra.mxu0 0.0
    %2939 = vmatprep.subr.mxu0 0.0
    %2940 = vmatpush1.msra.mxu0 0.0
    %2941 = vmatprep.subr.mxu0 0.0
    %2942 = vmatpush1.msra.mxu0 0.0
    %2943 = vmatprep.subr.mxu0 0.0
    %2944 = vmatpush1.msra.mxu0 0.0
    %2945 = vmatprep.subr.mxu0 0.0
    %2946 = vmatpush1.msra.mxu0 0.0
    %2947 = vmatprep.mubr.f32.mxu0 0.0
    %2948 = vmatmul.mubr.f32.gmra.mrb[0].mxu0 %v2881
    %v2949 = vpop.f32.mrb[0].mxu0
    %v2950 = vadd.f32 %v2804, %v2949
    %v2951 = vpop.f32.mrb[0].mxu0
    %v2952 = vadd.f32 %v2806, %v2951
    %2953 = vdwg.mxu0
    %2954 = vmatprep.subr.mxu0 %v2659
    %2955 = vmatpush1.msra.mxu0 %v2658
    %2956 = vmatprep.subr.mxu0 %v2663
    %2957 = vmatpush1.msra.mxu0 %v2662
    %2958 = vmatprep.subr.mxu0 %v2667
    %2959 = vmatpush1.msra.mxu0 %v2666
    %2960 = vmatprep.subr.mxu0 %v2671
    %2961 = vmatpush1.msra.mxu0 %v2670
    %2962 = vmatprep.subr.mxu0 0.0
    %2963 = vmatpush1.msra.mxu0 0.0
    %2964 = vmatprep.subr.mxu0 0.0
    %2965 = vmatpush1.msra.mxu0 0.0
    %2966 = vmatprep.subr.mxu0 0.0
    %2967 = vmatpush1.msra.mxu0 0.0
    %2968 = vmatprep.subr.mxu0 0.0
    %2969 = vmatpush1.msra.mxu0 0.0
    %2970 = vmatprep.subr.mxu0 0.0
    %2971 = vmatpush1.msra.mxu0 0.0
    %2972 = vmatprep.subr.mxu0 0.0
    %2973 = vmatpush1.msra.mxu0 0.0
    %2974 = vmatprep.subr.mxu0 0.0
    %2975 = vmatpush1.msra.mxu0 0.0
    %2976 = vmatprep.subr.mxu0 0.0
    %2977 = vmatpush1.msra.mxu0 0.0
    %2978 = vmatprep.subr.mxu0 0.0
    %2979 = vmatpush1.msra.mxu0 0.0
    %2980 = vmatprep.subr.mxu0 0.0
    %2981 = vmatpush1.msra.mxu0 0.0
    %2982 = vmatprep.subr.mxu0 0.0
    %2983 = vmatpush1.msra.mxu0 0.0
    %2984 = vmatprep.subr.mxu0 0.0
    %2985 = vmatpush1.msra.mxu0 0.0
    %2986 = vmatprep.subr.mxu0 0.0
    %2987 = vmatpush1.msra.mxu0 0.0
    %2988 = vmatprep.subr.mxu0 0.0
    %2989 = vmatpush1.msra.mxu0 0.0
    %2990 = vmatprep.subr.mxu0 0.0
    %2991 = vmatpush1.msra.mxu0 0.0
    %2992 = vmatprep.subr.mxu0 0.0
    %2993 = vmatpush1.msra.mxu0 0.0
    %2994 = vmatprep.subr.mxu0 0.0
    %2995 = vmatpush1.msra.mxu0 0.0
    %2996 = vmatprep.subr.mxu0 0.0
    %2997 = vmatpush1.msra.mxu0 0.0
    %2998 = vmatprep.subr.mxu0 0.0
    %2999 = vmatpush1.msra.mxu0 0.0
    %3000 = vmatprep.subr.mxu0 0.0
    %3001 = vmatpush1.msra.mxu0 0.0
    %3002 = vmatprep.subr.mxu0 0.0
    %3003 = vmatpush1.msra.mxu0 0.0
    %3004 = vmatprep.subr.mxu0 0.0
    %3005 = vmatpush1.msra.mxu0 0.0
    %3006 = vmatprep.subr.mxu0 0.0
    %3007 = vmatpush1.msra.mxu0 0.0
    %3008 = vmatprep.subr.mxu0 0.0
    %3009 = vmatpush1.msra.mxu0 0.0
    %3010 = vmatprep.subr.mxu0 0.0
    %3011 = vmatpush1.msra.mxu0 0.0
    %3012 = vmatprep.subr.mxu0 0.0
    %3013 = vmatpush1.msra.mxu0 0.0
    %3014 = vmatprep.subr.mxu0 0.0
    %3015 = vmatpush1.msra.mxu0 0.0
    %3016 = vmatprep.subr.mxu0 0.0
    %3017 = vmatpush1.msra.mxu0 0.0
    %3018 = vmatprep.mubr.f32.mxu0 0.0
    %3019 = vmatmul.mubr.f32.gmra.mrb[0].mxu0 %v2881
    %v3020 = vpop.f32.mrb[0].mxu0
    %v3021 = vadd.f32 %v2875, %v3020
    %v3022 = vpop.f32.mrb[0].mxu0
    %v3023 = vadd.f32 %v2877, %v3022
    %3024 = vdwg.mxu0
    %v3025 = vld [vmem:[%s9] sm:$0xf]
    %v3027 = vlaneseq
    %v3028 = vshrl.u32 %v3027, 7
    %v3029 = vsub.s32 0, %v3028
    %v3030 = vrot.slane %v3025, %v3029
    %v3031 = vlaneseq
    %v3032 = vshrl.u32 %v3031, 7
    %v3033 = vsub.s32 1, %v3032
    %v3034 = vrot.slane %v3025, %v3033
    %v3035 = vlaneseq
    %v3036 = vshrl.u32 %v3035, 7
    %v3037 = vsub.s32 2, %v3036
    %v3038 = vrot.slane %v3025, %v3037
    %v3039 = vlaneseq
    %v3040 = vshrl.u32 %v3039, 7
    %v3041 = vsub.s32 3, %v3040
    %v3042 = vrot.slane %v3025, %v3041
    %v3047 = vadd.f32 %v2950, %v3030
    %v3048 = vadd.f32 %v2952, %v3034
    %v3049 = vadd.f32 %v3021, %v3038
    %v3050 = vadd.f32 %v3023, %v3042
    %v3051 = vxor.u32 %v3047, 2147483648
    %v3052 = vmul.f32 %v3051, 1.442695
    %v3053 = vpow.pop %v3052
    %v3054 = vadd.f32 %v3053, 1.0
    %v3055 = vrcp.pop %v3054
    %v3056 = vmul.f32 1.0, %v3055
    %v3057 = vxor.u32 %v3048, 2147483648
    %v3058 = vmul.f32 %v3057, 1.442695
    %v3059 = vpow.pop %v3058
    %v3060 = vadd.f32 %v3059, 1.0
    %v3061 = vrcp.pop %v3060
    %v3062 = vmul.f32 1.0, %v3061
    %v3063 = vtanh.pop %v3049
    %v3064 = vxor.u32 %v3050, 2147483648
    %v3065 = vmul.f32 %v3064, 1.442695
    %v3066 = vpow.pop %v3065
    %v3067 = vadd.f32 %v3066, 1.0
    %v3068 = vrcp.pop %v3067
    %v3069 = vmul.f32 1.0, %v3068
    %v3070 = vld [vmem:[%s11] sm:$0xff]
    %v3071 = vmul.f32 %v3062, %v3070
    %v3072 = vmul.f32 %v3056, %v3063
    %v3073 = vadd.f32 %v3071, %v3072
    %v3074 = vtanh.pop %v3073
    %v3075 = vmul.f32 %v3069, %v3074
    %3076 = vst [vmem:[%s13] sm:$0xff] %v3073
    %3077 = vst [vmem:[%s12] sm:$0xff] %v3075
    // Predicated region
    $region58: #{_lambda_.1} parent=1 // pred_check
      _
    $region59: #{_lambda_.1} parent=1 // pred_check_branch
      %3079 = sbr.rel (0) target = $region61
    $region60: #{_lambda_.1} parent=1 // pred_region
      _
    $region61: #{_lambda_.1} parent=1 // pred_fallthru
      _
    // Predicated region
    $region62: #{_lambda_.1} parent=1 // pred_check
      _
    $region63: #{_lambda_.1} parent=1 // pred_check_branch
      %3081 = sbr.rel (0) target = $region65
    $region64: #{_lambda_.1} parent=1 // pred_region
      _
    $region65: #{_lambda_.1} parent=1 // pred_fallthru
      _
    // Predicated region
    $region66: #{_lambda_.1} parent=1 // pred_check
      _
    $region67: #{_lambda_.1} parent=1 // pred_check_branch
      %3083 = sbr.rel (0) target = $region69
    $region68: #{_lambda_.1} parent=1 // pred_region
      _
    $region69: #{_lambda_.1} parent=1 // pred_fallthru
      _
    // Predicated region
    $region70: #{_lambda_.1} parent=1 // pred_check
      _
    $region71: #{_lambda_.1} parent=1 // pred_check_branch
      %3085 = sbr.rel (0) target = $region73
    $region72: #{_lambda_.1} parent=1 // pred_region
      _
    $region73: #{_lambda_.1} parent=1 // pred_fallthru
      _
    %3086 = vsyncpa [#allocation3], 1
    %3087 = vsyncpa [#allocation5], 1

</llo_original>
